<compile_context>
chip_gen: v7x
topology: tpu7x:2x2x1
jax: 0.10.0
libtpu: 0.0.40
codegen_flags: <defaults>
</compile_context>

<pallas_src>
import functools

import jax
import jax.numpy as jnp
from jax.experimental import pallas as pl
from jax.experimental.pallas import tpu as pltpu


def attention_adapter_kernel(
    x_ref, ln_g_ref, ln_b_ref,
    w_in_ref, b_in_ref,        # fused [W_qkv | W_down]      : (D, 3D+hid), bias (1, 3D+hid)
    w_out_ref, b_out_ref,      # fused [W_proj ; W_up*scale] : (D+hid, D),  bias (1, D)
    out_ref,
    *, num_heads, head_dim, eps, attn_scale,
):
    x = x_ref[0].astype(jnp.float32)                    # (N, D)
    n_tok = x.shape[0]
    d = num_heads * head_dim

    # ---- LayerNorm (norm1), f32 statistics ----
    mean = jnp.mean(x, axis=-1, keepdims=True)
    var = jnp.mean((x - mean) ** 2, axis=-1, keepdims=True)
    y = (x - mean) * jax.lax.rsqrt(var + eps)
    y = y * ln_g_ref[...] + ln_b_ref[...]               # (N, D) f32

    # ---- fused qkv + adapter-down GEMM (bf16 MXU, f32 accumulate) ----
    qkvd = jnp.dot(y.astype(jnp.bfloat16), w_in_ref[...],
                   preferred_element_type=jnp.float32)
    qkvd = qkvd + b_in_ref[...]                         # (N, 3D + hid) f32

    q = qkvd[:, :d] * attn_scale                        # scale folded into q
    k = qkvd[:, d:2 * d]
    v = qkvd[:, 2 * d:3 * d]
    down = qkvd[:, 3 * d:]                              # adapter hidden (N, hid)

    # ---- head-batched attention: (H, N, Dh) with leading batch dim ----
    qh = jnp.transpose(q.reshape(n_tok, num_heads, head_dim), (1, 0, 2)).astype(jnp.bfloat16)
    kh = jnp.transpose(k.reshape(n_tok, num_heads, head_dim), (1, 0, 2)).astype(jnp.bfloat16)
    vh = jnp.transpose(v.reshape(n_tok, num_heads, head_dim), (1, 0, 2)).astype(jnp.bfloat16)

    s = jnp.einsum("hnd,hmd->hnm", qh, kh,
                   preferred_element_type=jnp.float32)  # (H, N, N) f32
    s = s - jnp.max(s, axis=-1, keepdims=True)
    p = jnp.exp(s)
    denom = jnp.sum(p, axis=-1, keepdims=True)
    p = p * pl.reciprocal(denom, approx=True)           # EUP reciprocal, frees VALU slots

    o = jnp.einsum("hnm,hmd->hnd", p.astype(jnp.bfloat16), vh,
                   preferred_element_type=jnp.float32)  # (H, N, Dh) f32
    attn_out = jnp.transpose(o, (1, 0, 2)).reshape(n_tok, d)  # (N, D)

    # ---- fused output GEMM: [attn_out | relu(down)] @ [W_proj ; W_up*scale] ----
    relu_down = jnp.maximum(down, 0.0)
    fused_act = jnp.concatenate([attn_out, relu_down], axis=-1).astype(jnp.bfloat16)
    out_fused = jnp.dot(fused_act, w_out_ref[...],
                        preferred_element_type=jnp.float32)
    out_fused = out_fused + b_out_ref[...]              # attn proj + adapter up, biases included

    # residual base is the *normed* activation (matches the PyTorch forward)
    out_ref[0] = (y + out_fused).astype(out_ref.dtype)  # single lane-dense full-tile store


def attention_with_adapter(x, params, *, num_heads, eps=1e-5, adapter_scale=1.0):
    B, N, D = x.shape
    head_dim = D // num_heads
    hid = params["w_down_t"].shape[1]

    # --- wrapper-side weight fusion / bf16 casting (traced once, outside the kernel) ---
    w_in = jnp.concatenate([params["w_qkv_t"], params["w_down_t"]], axis=1).astype(jnp.bfloat16)
    b_in = jnp.concatenate([params["b_qkv"], params["b_down"]], axis=1).astype(jnp.float32)
    w_out = jnp.concatenate([params["w_proj_t"],
                             params["w_up_t"] * adapter_scale], axis=0).astype(jnp.bfloat16)
    b_out = (params["b_proj"] + params["b_up"] * adapter_scale).astype(jnp.float32)
    ln_g = params["ln_g"].astype(jnp.float32)
    ln_b = params["ln_b"].astype(jnp.float32)

    kernel = functools.partial(
        attention_adapter_kernel,
        num_heads=num_heads,
        head_dim=head_dim,
        eps=eps,
        attn_scale=head_dim ** -0.5,
    )

    def const_spec(shape):
        return pl.BlockSpec(shape, lambda b: (0,) * len(shape))

    in_specs = [
        pl.BlockSpec((1, N, D), lambda b: (b, 0, 0)),     # x: one batch per grid step
        const_spec((1, D)), const_spec((1, D)),           # LN gamma / beta
        const_spec((D, 3 * D + hid)), const_spec((1, 3 * D + hid)),   # fused in-GEMM
        const_spec((D + hid, D)), const_spec((1, D)),     # fused out-GEMM
    ]

    # advisory cost estimate so XLA schedules neighbors sensibly
    flops = (2 * B * N * D * (3 * D + hid)                 # fused qkv + down GEMM
             + 4 * B * num_heads * N * N * head_dim        # QK^T and PV
             + 2 * B * N * (D + hid) * D)                  # fused proj + up GEMM
    transcendentals = B * num_heads * N * (N + 1)          # exp + reciprocal
    bytes_accessed = (2 * x.size * x.dtype.itemsize        # x in + out
                      + 2 * (w_in.size + w_out.size)       # bf16 weights
                      + 4 * (b_in.size + b_out.size + ln_g.size + ln_b.size))

    return pl.pallas_call(
        kernel,
        out_shape=jax.ShapeDtypeStruct((B, N, D), x.dtype),
        grid=(B,),
        in_specs=in_specs,
        out_specs=pl.BlockSpec((1, N, D), lambda b: (b, 0, 0)),
        compiler_params=pltpu.CompilerParams(
            dimension_semantics=("parallel",),
            vmem_limit_bytes=48 * 1024 * 1024,
        ),
        cost_estimate=pl.CostEstimate(
            flops=flops,
            transcendentals=transcendentals,
            bytes_accessed=bytes_accessed,
        ),
    )(x, ln_g, ln_b, w_in, b_in, w_out, b_out)


def reference(x, params, *, num_heads, eps=1e-5, adapter_scale=1.0):
    """Pure-JAX f32 reference mirroring the PyTorch forward (for correctness check)."""
    B, N, D = x.shape
    Dh = D // num_heads
    mean = x.mean(-1, keepdims=True)
    var = ((x - mean) ** 2).mean(-1, keepdims=True)
    y = (x - mean) / jnp.sqrt(var + eps) * params["ln_g"][0] + params["ln_b"][0]

    qkv = y @ params["w_qkv_t"] + params["b_qkv"][0]
    qkv = qkv.reshape(B, N, 3, num_heads, Dh).transpose(2, 0, 3, 1, 4)
    q, k, v = qkv[0], qkv[1], qkv[2]                      # (B, H, N, Dh)
    s = jnp.einsum("bhnd,bhmd->bhnm", q, k) * (Dh ** -0.5)
    p = jax.nn.softmax(s, axis=-1)
    o = jnp.einsum("bhnm,bhmd->bhnd", p, v).transpose(0, 2, 1, 3).reshape(B, N, D)
    attn_out = o @ params["w_proj_t"] + params["b_proj"][0]

    down = jnp.maximum(y @ params["w_down_t"] + params["b_down"][0], 0.0)
    up = (down @ params["w_up_t"] + params["b_up"][0]) * adapter_scale
    return y + attn_out + up


if __name__ == "__main__":
    # Small, module-consistent shapes.
    B, N, D = 2, 8, 32        # batch, tokens, num_features
    num_heads = 4
    r = 4
    hid = D // r              # adapter hidden_features
    adapter_scale = 1.0       # adapter_scalar='1.0'

    key = jax.random.PRNGKey(0)
    keys = jax.random.split(key, 12)

    # Deterministic parameter init (synthetic; nonzero so all paths are exercised).
    params = {
        "ln_g":     jnp.ones((1, D), jnp.float32),
        "ln_b":     jnp.zeros((1, D), jnp.float32),
        "w_qkv_t":  0.05 * jax.random.normal(keys[0], (D, 3 * D), jnp.float32),
        "b_qkv":    0.01 * jax.random.normal(keys[1], (1, 3 * D), jnp.float32),
        "w_proj_t": 0.05 * jax.random.normal(keys[2], (D, D), jnp.float32),
        "b_proj":   0.01 * jax.random.normal(keys[3], (1, D), jnp.float32),
        "w_down_t": 0.05 * jax.random.normal(keys[4], (D, hid), jnp.float32),
        "b_down":   jnp.zeros((1, hid), jnp.float32),
        "w_up_t":   0.05 * jax.random.normal(keys[5], (hid, D), jnp.float32),
        "b_up":     jnp.zeros((1, D), jnp.float32),
    }

    x = jax.random.normal(keys[6], (B, N, D), jnp.float32)

    out = attention_with_adapter(x, params, num_heads=num_heads,
                                 adapter_scale=adapter_scale)
    out = jax.block_until_ready(out)

    ref = reference(x, params, num_heads=num_heads, adapter_scale=adapter_scale)
    assert out.shape == (B, N, D)
    # Kernel feeds bf16 into the MXU (f32 accumulation); compare against the f32
    # reference with a tolerance that covers bf16 input rounding (~1e-3 here).
    max_err = jnp.max(jnp.abs(out - ref))
    assert jnp.allclose(out, ref, atol=2e-2, rtol=2e-2), f"max abs err = {max_err}"

    print("KERNEL_OK")
</pallas_src>

<mosaic_0001>
module attributes {stable_mosaic.version = 11 : i64} {
  func.func @attention_adapter_kernel(%arg0: i32, %arg1: memref<1x8x32xf32, #tpu.memory_space<vmem>>, %arg2: memref<1x32xf32, #tpu.memory_space<vmem>>, %arg3: memref<1x32xf32, #tpu.memory_space<vmem>>, %arg4: memref<32x104xbf16, #tpu.memory_space<vmem>>, %arg5: memref<1x104xf32, #tpu.memory_space<vmem>>, %arg6: memref<40x32xbf16, #tpu.memory_space<vmem>>, %arg7: memref<1x32xf32, #tpu.memory_space<vmem>>, %arg8: memref<1x8x32xf32, #tpu.memory_space<vmem>>) attributes {dimension_semantics = [#tpu.dimension_semantics<parallel>], iteration_bounds = array<i64: 2>, scalar_prefetch = 0 : i64, scratch_operands = 0 : i64, tpu.core_type = #tpu.core_type<tc>, window_params = [{transform_indices = @transform_0, window_bounds = array<i64: 1, 8, 32>}, {pipeline_mode = #tpu.pipeline_mode<synchronous>, transform_indices = @transform_1, window_bounds = array<i64: 1, 32>}, {pipeline_mode = #tpu.pipeline_mode<synchronous>, transform_indices = @transform_2, window_bounds = array<i64: 1, 32>}, {pipeline_mode = #tpu.pipeline_mode<synchronous>, transform_indices = @transform_3, window_bounds = array<i64: 32, 104>}, {pipeline_mode = #tpu.pipeline_mode<synchronous>, transform_indices = @transform_4, window_bounds = array<i64: 1, 104>}, {pipeline_mode = #tpu.pipeline_mode<synchronous>, transform_indices = @transform_5, window_bounds = array<i64: 40, 32>}, {pipeline_mode = #tpu.pipeline_mode<synchronous>, transform_indices = @transform_6, window_bounds = array<i64: 1, 32>}, {transform_indices = @transform_7, window_bounds = array<i64: 1, 8, 32>}]} {
    %c0 = arith.constant 0 : index
    %c0_0 = arith.constant 0 : index
    %c0_1 = arith.constant 0 : index
    %0 = vector.load %arg1[%c0, %c0_0, %c0_1] : memref<1x8x32xf32, #tpu.memory_space<vmem>>, vector<1x8x32xf32>
    %1 = vector.shape_cast %0 : vector<1x8x32xf32> to vector<8x32xf32>
    %cst = arith.constant dense<0.000000e+00> : vector<8xf32>
    %2 = vector.multi_reduction <add>, %1, %cst [1] : vector<8x32xf32> to vector<8xf32>
    %3 = vector.shape_cast %2 : vector<8xf32> to vector<8x1xf32>
    %cst_2 = arith.constant 3.200000e+01 : f32
    %4 = vector.broadcast %cst_2 : f32 to vector<8x1xf32>
    %5 = arith.divf %3, %4 : vector<8x1xf32>
    %6 = vector.broadcast %5 : vector<8x1xf32> to vector<8x32xf32>
    %7 = arith.subf %1, %6 : vector<8x32xf32>
    %8 = arith.mulf %7, %7 : vector<8x32xf32>
    %cst_3 = arith.constant dense<0.000000e+00> : vector<8xf32>
    %9 = vector.multi_reduction <add>, %8, %cst_3 [1] : vector<8x32xf32> to vector<8xf32>
    %10 = vector.shape_cast %9 : vector<8xf32> to vector<8x1xf32>
    %cst_4 = arith.constant 3.200000e+01 : f32
    %11 = vector.broadcast %cst_4 : f32 to vector<8x1xf32>
    %12 = arith.divf %10, %11 : vector<8x1xf32>
    %13 = vector.broadcast %5 : vector<8x1xf32> to vector<8x32xf32>
    %14 = arith.subf %1, %13 : vector<8x32xf32>
    %cst_5 = arith.constant 9.99999974E-6 : f32
    %15 = vector.broadcast %cst_5 : f32 to vector<8x1xf32>
    %16 = arith.addf %12, %15 : vector<8x1xf32>
    %17 = math.rsqrt %16 : vector<8x1xf32>
    %18 = vector.broadcast %17 : vector<8x1xf32> to vector<8x32xf32>
    %19 = arith.mulf %14, %18 : vector<8x32xf32>
    %c0_6 = arith.constant 0 : index
    %c0_7 = arith.constant 0 : index
    %20 = vector.load %arg2[%c0_6, %c0_7] : memref<1x32xf32, #tpu.memory_space<vmem>>, vector<1x32xf32>
    %21 = vector.broadcast %20 : vector<1x32xf32> to vector<8x32xf32>
    %22 = arith.mulf %19, %21 : vector<8x32xf32>
    %c0_8 = arith.constant 0 : index
    %c0_9 = arith.constant 0 : index
    %23 = vector.load %arg3[%c0_8, %c0_9] : memref<1x32xf32, #tpu.memory_space<vmem>>, vector<1x32xf32>
    %24 = vector.broadcast %23 : vector<1x32xf32> to vector<8x32xf32>
    %25 = arith.addf %22, %24 : vector<8x32xf32>
    %26 = arith.truncf %25 : vector<8x32xf32> to vector<8x32xbf16>
    %c0_10 = arith.constant 0 : index
    %c0_11 = arith.constant 0 : index
    %27 = vector.load %arg4[%c0_10, %c0_11] : memref<32x104xbf16, #tpu.memory_space<vmem>>, vector<32x104xbf16>
    %cst_12 = arith.constant dense<0.000000e+00> : vector<8x104xf32>
    %28 = tpu.matmul %26, %27, %cst_12 {dimension_numbers = #tpu.dot_dimension_numbers<[1], [0], [0], [1], [0, 0, 1, 1], [], []>} : vector<8x32xbf16>, vector<32x104xbf16>, vector<8x104xf32> -> vector<8x104xf32>
    %c0_13 = arith.constant 0 : index
    %c0_14 = arith.constant 0 : index
    %29 = vector.load %arg5[%c0_13, %c0_14] : memref<1x104xf32, #tpu.memory_space<vmem>>, vector<1x104xf32>
    %30 = vector.broadcast %29 : vector<1x104xf32> to vector<8x104xf32>
    %31 = arith.addf %28, %30 : vector<8x104xf32>
    %32 = vector.extract_strided_slice %31 {offsets = [0, 0], sizes = [8, 32], strides = [1, 1]} : vector<8x104xf32> to vector<8x32xf32>
    %cst_15 = arith.constant 0.353553385 : f32
    %33 = vector.broadcast %cst_15 : f32 to vector<8x32xf32>
    %34 = arith.mulf %32, %33 : vector<8x32xf32>
    %35 = vector.extract_strided_slice %31 {offsets = [0, 32], sizes = [8, 32], strides = [1, 1]} : vector<8x104xf32> to vector<8x32xf32>
    %36 = vector.extract_strided_slice %31 {offsets = [0, 64], sizes = [8, 32], strides = [1, 1]} : vector<8x104xf32> to vector<8x32xf32>
    %37 = vector.extract_strided_slice %31 {offsets = [0, 96], sizes = [8, 8], strides = [1, 1]} : vector<8x104xf32> to vector<8x8xf32>
    %38 = vector.shape_cast %34 : vector<8x32xf32> to vector<8x4x8xf32>
    %39 = tpu.transpose %38, [1, 0, 2] : vector<8x4x8xf32> -> vector<4x8x8xf32>
    %40 = arith.truncf %39 : vector<4x8x8xf32> to vector<4x8x8xbf16>
    %41 = vector.shape_cast %35 : vector<8x32xf32> to vector<8x4x8xf32>
    %42 = tpu.transpose %41, [1, 0, 2] : vector<8x4x8xf32> -> vector<4x8x8xf32>
    %43 = arith.truncf %42 : vector<4x8x8xf32> to vector<4x8x8xbf16>
    %44 = vector.shape_cast %36 : vector<8x32xf32> to vector<8x4x8xf32>
    %45 = tpu.transpose %44, [1, 0, 2] : vector<8x4x8xf32> -> vector<4x8x8xf32>
    %46 = arith.truncf %45 : vector<4x8x8xf32> to vector<4x8x8xbf16>
    "tpu.trace_start"() <{level = 10 : i32, message = "hnd,hmd->hnm"}> : () -> ()
    %cst_16 = arith.constant dense<0.000000e+00> : vector<4x8x8xf32>
    %47 = tpu.matmul %40, %43, %cst_16 {dimension_numbers = #tpu.dot_dimension_numbers<[2], [2], [1], [1], [0, 0, 0, 1, 1, 1], [0], [0]>} : vector<4x8x8xbf16>, vector<4x8x8xbf16>, vector<4x8x8xf32> -> vector<4x8x8xf32>
    "tpu.trace_stop"() : () -> ()
    %cst_17 = arith.constant dense<0xFF800000> : vector<4x8xf32>
    %48 = vector.multi_reduction <maximumf>, %47, %cst_17 [2] : vector<4x8x8xf32> to vector<4x8xf32>
    %49 = vector.shape_cast %48 : vector<4x8xf32> to vector<4x8x1xf32>
    %50 = vector.broadcast %49 : vector<4x8x1xf32> to vector<4x8x8xf32>
    %51 = arith.subf %47, %50 : vector<4x8x8xf32>
    %52 = math.exp %51 : vector<4x8x8xf32>
    %cst_18 = arith.constant dense<0.000000e+00> : vector<4x8xf32>
    %53 = vector.multi_reduction <add>, %52, %cst_18 [2] : vector<4x8x8xf32> to vector<4x8xf32>
    %54 = vector.shape_cast %53 : vector<4x8xf32> to vector<4x8x1xf32>
    %55 = tpu.reciprocal %54 {approx = true} : vector<4x8x1xf32> -> vector<4x8x1xf32>
    %56 = vector.broadcast %55 : vector<4x8x1xf32> to vector<4x8x8xf32>
    %57 = arith.mulf %52, %56 : vector<4x8x8xf32>
    %58 = arith.truncf %57 : vector<4x8x8xf32> to vector<4x8x8xbf16>
    "tpu.trace_start"() <{level = 10 : i32, message = "hnm,hmd->hnd"}> : () -> ()
    %cst_19 = arith.constant dense<0.000000e+00> : vector<4x8x8xf32>
    %59 = tpu.matmul %58, %46, %cst_19 {dimension_numbers = #tpu.dot_dimension_numbers<[2], [1], [1], [2], [0, 0, 0, 1, 1, 2], [0], [0]>} : vector<4x8x8xbf16>, vector<4x8x8xbf16>, vector<4x8x8xf32> -> vector<4x8x8xf32>
    "tpu.trace_stop"() : () -> ()
    %60 = tpu.transpose %59, [1, 0, 2] : vector<4x8x8xf32> -> vector<8x4x8xf32>
    %61 = vector.shape_cast %60 : vector<8x4x8xf32> to vector<8x32xf32>
    %cst_20 = arith.constant 0.000000e+00 : f32
    %62 = vector.broadcast %cst_20 : f32 to vector<8x8xf32>
    %63 = arith.maximumf %37, %62 : vector<8x8xf32>
    %64 = tpu.concatenate %61, %63 in 1 : vector<8x32xf32>, vector<8x8xf32> -> vector<8x40xf32>
    %65 = arith.truncf %64 : vector<8x40xf32> to vector<8x40xbf16>
    %c0_21 = arith.constant 0 : index
    %c0_22 = arith.constant 0 : index
    %66 = vector.load %arg6[%c0_21, %c0_22] : memref<40x32xbf16, #tpu.memory_space<vmem>>, vector<40x32xbf16>
    %cst_23 = arith.constant dense<0.000000e+00> : vector<8x32xf32>
    %67 = tpu.matmul %65, %66, %cst_23 {dimension_numbers = #tpu.dot_dimension_numbers<[1], [0], [0], [1], [0, 0, 1, 1], [], []>} : vector<8x40xbf16>, vector<40x32xbf16>, vector<8x32xf32> -> vector<8x32xf32>
    %c0_24 = arith.constant 0 : index
    %c0_25 = arith.constant 0 : index
    %68 = vector.load %arg7[%c0_24, %c0_25] : memref<1x32xf32, #tpu.memory_space<vmem>>, vector<1x32xf32>
    %69 = vector.broadcast %68 : vector<1x32xf32> to vector<8x32xf32>
    %70 = arith.addf %67, %69 : vector<8x32xf32>
    %71 = arith.addf %25, %70 : vector<8x32xf32>
    %c0_26 = arith.constant 0 : index
    %c0_27 = arith.constant 0 : index
    %c0_28 = arith.constant 0 : index
    %72 = vector.load %arg8[%c0_26, %c0_27, %c0_28] : memref<1x8x32xf32, #tpu.memory_space<vmem>>, vector<1x8x32xf32>
    %73 = vector.shape_cast %72 : vector<1x8x32xf32> to vector<8x32xf32>
    %74 = vector.shape_cast %71 : vector<8x32xf32> to vector<1x8x32xf32>
    tpu.vector_store %arg8[%c0_26, %c0_27, %c0_28], %74 {strides = array<i32>} : memref<1x8x32xf32, #tpu.memory_space<vmem>>, vector<1x8x32xf32>,
    return
  }
  func.func @transform_0(%arg0: i32) -> (i32, i32, i32) {
    %c0_i32 = arith.constant 0 : i32
    %c0_i32_0 = arith.constant 0 : i32
    %c0_i32_1 = arith.constant 0 : i32
    return %arg0, %c0_i32, %c0_i32_0 : i32, i32, i32
  }
  func.func @transform_1(%arg0: i32) -> (i32, i32) {
    %c0_i32 = arith.constant 0 : i32
    %c0_i32_0 = arith.constant 0 : i32
    %c0_i32_1 = arith.constant 0 : i32
    return %c0_i32, %c0_i32_0 : i32, i32
  }
  func.func @transform_2(%arg0: i32) -> (i32, i32) {
    %c0_i32 = arith.constant 0 : i32
    %c0_i32_0 = arith.constant 0 : i32
    %c0_i32_1 = arith.constant 0 : i32
    return %c0_i32, %c0_i32_0 : i32, i32
  }
  func.func @transform_3(%arg0: i32) -> (i32, i32) {
    %c0_i32 = arith.constant 0 : i32
    %c0_i32_0 = arith.constant 0 : i32
    %c0_i32_1 = arith.constant 0 : i32
    return %c0_i32, %c0_i32_0 : i32, i32
  }
  func.func @transform_4(%arg0: i32) -> (i32, i32) {
    %c0_i32 = arith.constant 0 : i32
    %c0_i32_0 = arith.constant 0 : i32
    %c0_i32_1 = arith.constant 0 : i32
    return %c0_i32, %c0_i32_0 : i32, i32
  }
  func.func @transform_5(%arg0: i32) -> (i32, i32) {
    %c0_i32 = arith.constant 0 : i32
    %c0_i32_0 = arith.constant 0 : i32
    %c0_i32_1 = arith.constant 0 : i32
    return %c0_i32, %c0_i32_0 : i32, i32
  }
  func.func @transform_6(%arg0: i32) -> (i32, i32) {
    %c0_i32 = arith.constant 0 : i32
    %c0_i32_0 = arith.constant 0 : i32
    %c0_i32_1 = arith.constant 0 : i32
    return %c0_i32, %c0_i32_0 : i32, i32
  }
  func.func @transform_7(%arg0: i32) -> (i32, i32, i32) {
    %c0_i32 = arith.constant 0 : i32
    %c0_i32_0 = arith.constant 0 : i32
    %c0_i32_1 = arith.constant 0 : i32
    return %arg0, %c0_i32, %c0_i32_0 : i32, i32, i32
  }
}

</mosaic_0001>

<llo_original>
// kernel: tpu_custom_call.1
$region0: #{tpu_custom_call.1}
  #allocation0 [shape = 'u32[]', space=smem, size = 0x4, offset = 0x4, fixed_abs, tag = 'smem constant byte address 0x4 - core index']
  #allocation1 [shape = 'u32[144,128]{1,0:T(1,128)}', space=vmem, size = 0x12000, scoped, tag = 'internal scratch']
  %s0 = inlined_call_operand.vmem [shape: f32[2,8,32], index: 0, kind: input, shape index: {}]
  %s1 = inlined_call_operand.vmem [shape: f32[1,32], index: 1, kind: input, shape index: {}]
  %s2 = inlined_call_operand.vmem [shape: f32[1,32], index: 2, kind: input, shape index: {}]
  %s3 = inlined_call_operand.vmem [shape: bf16[32,104], index: 3, kind: input, shape index: {}]
  %s4 = inlined_call_operand.vmem [shape: f32[1,104], index: 4, kind: input, shape index: {}]
  %s5 = inlined_call_operand.vmem [shape: bf16[40,32], index: 5, kind: input, shape index: {}]
  %s6 = inlined_call_operand.vmem [shape: f32[1,32], index: 6, kind: input, shape index: {}]
  %s7 = inlined_call_operand.hbm [shape: f32[2,8,32], index: 7, kind: output, shape index: {}]
  %s8 = sld [smem:[#allocation0]]
  $region61: #{tpu_custom_call.1} parent=0
    _
  %s10 = ssub.s32 1, %s8
  %s11 = scalar_select 0, %s10, %s8
  $region1: #{tpu_custom_call.1} parent=0
    #allocation2 [shape = 'u8[8192]{0}', space=vmem, size = 0x2000, scoped, tag = 'output window, operand 0']
    #allocation3 [shape = 's32[2]{0}', space=sflag, size = 0x8, scoped, tag = 'scoped memory for tpu_custom_call.1']
    %12 = vsyncpa [#allocation3], 0
    %s13 = scalar_lea.sflag [#allocation3], 1
    %14 = vsyncpa %s13, 0
    loop: start=0, step=1, limit=4
    $region2: #{tpu_custom_call.1} parent=1 // loop_pre_header
      _
    $region3: #{tpu_custom_call.1} parent=1 // loop_header
      %s16 = sphi 0, %s20
      %p17 = scmp.ge.s32.totalorder %s16, 4
      %s26 = sphi 0, %s28
      %s29 = sphi 0, %s26
      %s30 = sphi 0, %s29
      %s46 = sphi 0, %s30
      %s50 = sphi 0, %s50
      %s52 = sphi 0, %s50
      %s53 = sphi 0, %s52
      %s67 = sphi 0, %s53
      %s71 = sphi 0, %s71
      %s73 = sphi 0, %s71
      %s74 = sphi 0, %s73
      %s88 = sphi 0, %s74
      %s92 = sphi 0, %s92
      %s94 = sphi 0, %s92
      %s95 = sphi 0, %s94
      %s109 = sphi 0, %s95
      %s113 = sphi 0, %s113
      %s115 = sphi 0, %s113
      %s116 = sphi 0, %s115
      %s130 = sphi 0, %s116
      %s134 = sphi 0, %s134
      %s136 = sphi 0, %s134
      %s137 = sphi 0, %s136
      %s151 = sphi 0, %s137
      %s155 = sphi 0, %s155
      %s157 = sphi 0, %s155
      %s158 = sphi 0, %s157
      %s172 = sphi 0, %s158
      %s178 = sphi 0, %s180
      %s181 = sphi 0, %s178
      %s182 = sphi 0, %s181
      %s198 = sphi 0, %s182
    $region4: #{tpu_custom_call.1} parent=1 // loop_header_branch
      %19 = sbr.rel (%p17) target = $region8
    $region5: #{tpu_custom_call.1} parent=1 // loop_body
      %s21 = ssub.s32 %s16, 1
      %s22 = ssub.s32 %s16, 2
      %s23 = sadd.s32 %s16, 1
      %s24 = ssub.s32 %s16, %s23
      %p25 = scmp.eq.s32.totalorder %s24, 0
      %s27 = sadd.s32 %s26, 1
      %s28 = scalar_select %p25, %s26, %s27
      %p31 = pneg %p25
      %p32 = scmp.eq.s32.totalorder %s16, 1
      %p33 = por %p31, %p32
      %p34 = scmp.ne.s32.totalorder %s26, %s29
      %p35 = scmp.eq.s32.totalorder %s16, 0
      %p36 = por %p34, %p35
      %p37 = scmp.ne.s32.totalorder %s26, %s29
      %p38 = scmp.eq.s32.totalorder %s21, 1
      %p39 = por %p37, %p38
      %p40 = scmp.ne.s32.totalorder %s29, %s30
      %p41 = scmp.eq.s32.totalorder %s21, 0
      %p42 = por %p40, %p41
      %p43 = scmp.ne.s32.totalorder %s29, %s30
      %p44 = scmp.eq.s32.totalorder %s22, 1
      %p45 = por %p43, %p44
      %p47 = scmp.ne.s32.totalorder %s30, %s46
      %p48 = scmp.eq.s32.totalorder %s22, 0
      %p49 = por %p47, %p48
      %s51 = sadd.s32 %s50, 1
      %p54 = scmp.eq.s32.totalorder %s16, 1
      %p55 = scmp.ne.s32.totalorder %s50, %s52
      %p56 = scmp.eq.s32.totalorder %s16, 0
      %p57 = por %p55, %p56
      %p58 = scmp.ne.s32.totalorder %s50, %s52
      %p59 = scmp.eq.s32.totalorder %s21, 1
      %p60 = por %p58, %p59
      %p61 = scmp.ne.s32.totalorder %s52, %s53
      %p62 = scmp.eq.s32.totalorder %s21, 0
      %p63 = por %p61, %p62
      %p64 = scmp.ne.s32.totalorder %s52, %s53
      %p65 = scmp.eq.s32.totalorder %s22, 1
      %p66 = por %p64, %p65
      %p68 = scmp.ne.s32.totalorder %s53, %s67
      %p69 = scmp.eq.s32.totalorder %s22, 0
      %p70 = por %p68, %p69
      %s72 = sadd.s32 %s71, 1
      %p75 = scmp.eq.s32.totalorder %s16, 1
      %p76 = scmp.ne.s32.totalorder %s71, %s73
      %p77 = scmp.eq.s32.totalorder %s16, 0
      %p78 = por %p76, %p77
      %p79 = scmp.ne.s32.totalorder %s71, %s73
      %p80 = scmp.eq.s32.totalorder %s21, 1
      %p81 = por %p79, %p80
      %p82 = scmp.ne.s32.totalorder %s73, %s74
      %p83 = scmp.eq.s32.totalorder %s21, 0
      %p84 = por %p82, %p83
      %p85 = scmp.ne.s32.totalorder %s73, %s74
      %p86 = scmp.eq.s32.totalorder %s22, 1
      %p87 = por %p85, %p86
      %p89 = scmp.ne.s32.totalorder %s74, %s88
      %p90 = scmp.eq.s32.totalorder %s22, 0
      %p91 = por %p89, %p90
      %s93 = sadd.s32 %s92, 1
      %p96 = scmp.eq.s32.totalorder %s16, 1
      %p97 = scmp.ne.s32.totalorder %s92, %s94
      %p98 = scmp.eq.s32.totalorder %s16, 0
      %p99 = por %p97, %p98
      %p100 = scmp.ne.s32.totalorder %s92, %s94
      %p101 = scmp.eq.s32.totalorder %s21, 1
      %p102 = por %p100, %p101
      %p103 = scmp.ne.s32.totalorder %s94, %s95
      %p104 = scmp.eq.s32.totalorder %s21, 0
      %p105 = por %p103, %p104
      %p106 = scmp.ne.s32.totalorder %s94, %s95
      %p107 = scmp.eq.s32.totalorder %s22, 1
      %p108 = por %p106, %p107
      %p110 = scmp.ne.s32.totalorder %s95, %s109
      %p111 = scmp.eq.s32.totalorder %s22, 0
      %p112 = por %p110, %p111
      %s114 = sadd.s32 %s113, 1
      %p117 = scmp.eq.s32.totalorder %s16, 1
      %p118 = scmp.ne.s32.totalorder %s113, %s115
      %p119 = scmp.eq.s32.totalorder %s16, 0
      %p120 = por %p118, %p119
      %p121 = scmp.ne.s32.totalorder %s113, %s115
      %p122 = scmp.eq.s32.totalorder %s21, 1
      %p123 = por %p121, %p122
      %p124 = scmp.ne.s32.totalorder %s115, %s116
      %p125 = scmp.eq.s32.totalorder %s21, 0
      %p126 = por %p124, %p125
      %p127 = scmp.ne.s32.totalorder %s115, %s116
      %p128 = scmp.eq.s32.totalorder %s22, 1
      %p129 = por %p127, %p128
      %p131 = scmp.ne.s32.totalorder %s116, %s130
      %p132 = scmp.eq.s32.totalorder %s22, 0
      %p133 = por %p131, %p132
      %s135 = sadd.s32 %s134, 1
      %p138 = scmp.eq.s32.totalorder %s16, 1
      %p139 = scmp.ne.s32.totalorder %s134, %s136
      %p140 = scmp.eq.s32.totalorder %s16, 0
      %p141 = por %p139, %p140
      %p142 = scmp.ne.s32.totalorder %s134, %s136
      %p143 = scmp.eq.s32.totalorder %s21, 1
      %p144 = por %p142, %p143
      %p145 = scmp.ne.s32.totalorder %s136, %s137
      %p146 = scmp.eq.s32.totalorder %s21, 0
      %p147 = por %p145, %p146
      %p148 = scmp.ne.s32.totalorder %s136, %s137
      %p149 = scmp.eq.s32.totalorder %s22, 1
      %p150 = por %p148, %p149
      %p152 = scmp.ne.s32.totalorder %s137, %s151
      %p153 = scmp.eq.s32.totalorder %s22, 0
      %p154 = por %p152, %p153
      %s156 = sadd.s32 %s155, 1
      %p159 = scmp.eq.s32.totalorder %s16, 1
      %p160 = scmp.ne.s32.totalorder %s155, %s157
      %p161 = scmp.eq.s32.totalorder %s16, 0
      %p162 = por %p160, %p161
      %p163 = scmp.ne.s32.totalorder %s155, %s157
      %p164 = scmp.eq.s32.totalorder %s21, 1
      %p165 = por %p163, %p164
      %p166 = scmp.ne.s32.totalorder %s157, %s158
      %p167 = scmp.eq.s32.totalorder %s21, 0
      %p168 = por %p166, %p167
      %p169 = scmp.ne.s32.totalorder %s157, %s158
      %p170 = scmp.eq.s32.totalorder %s22, 1
      %p171 = por %p169, %p170
      %p173 = scmp.ne.s32.totalorder %s158, %s172
      %p174 = scmp.eq.s32.totalorder %s22, 0
      %p175 = por %p173, %p174
      %s176 = ssub.s32 %s16, %s23
      %p177 = scmp.eq.s32.totalorder %s176, 0
      %s179 = sadd.s32 %s178, 1
      %s180 = scalar_select %p177, %s178, %s179
      %p183 = pneg %p177
      %p184 = scmp.eq.s32.totalorder %s16, 1
      %p185 = por %p183, %p184
      %p186 = scmp.ne.s32.totalorder %s178, %s181
      %p187 = scmp.eq.s32.totalorder %s16, 0
      %p188 = por %p186, %p187
      %p189 = scmp.ne.s32.totalorder %s178, %s181
      %p190 = scmp.eq.s32.totalorder %s21, 1
      %p191 = por %p189, %p190
      %p192 = scmp.ne.s32.totalorder %s181, %s182
      %p193 = scmp.eq.s32.totalorder %s21, 0
      %p194 = por %p192, %p193
      %p195 = scmp.ne.s32.totalorder %s181, %s182
      %p196 = scmp.eq.s32.totalorder %s22, 1
      %p197 = por %p195, %p196
      %p199 = scmp.ne.s32.totalorder %s182, %s198
      %p200 = scmp.eq.s32.totalorder %s22, 0
      %p201 = por %p199, %p200
      %p202 = scmp.le.s32.totalorder 1, %s16
      %p203 = scmp.lt.s32.totalorder %s16, 3
      %p204 = pnand %p202, %p203
      %p205 = pneg %p204
      // Predicated region
      $region9: #{tpu_custom_call.1} parent=5 // pred_check
        _
      $region10: #{tpu_custom_call.1} parent=5 // pred_check_branch
        %207 = sbr.rel (%p204) target = $region12
      $region11: #{tpu_custom_call.1} parent=5 // pred_region
        %s208 = ssub.s32 %s16, 1
        // Predicated region
        $region13: #{tpu_custom_call.1} parent=11 // pred_check
          %p209 = pneg %p63
        $region14: #{tpu_custom_call.1} parent=11 // pred_check_branch
          %211 = sbr.rel (%p209) target = $region16
        $region15: #{tpu_custom_call.1} parent=11 // pred_region
          _
        $region16: #{tpu_custom_call.1} parent=11 // pred_fallthru
          _
        // Predicated region
        $region17: #{tpu_custom_call.1} parent=11 // pred_check
          %p212 = pneg %p84
        $region18: #{tpu_custom_call.1} parent=11 // pred_check_branch
          %214 = sbr.rel (%p212) target = $region20
        $region19: #{tpu_custom_call.1} parent=11 // pred_region
          _
        $region20: #{tpu_custom_call.1} parent=11 // pred_fallthru
          _
        // Predicated region
        $region21: #{tpu_custom_call.1} parent=11 // pred_check
          %p215 = pneg %p105
        $region22: #{tpu_custom_call.1} parent=11 // pred_check_branch
          %217 = sbr.rel (%p215) target = $region24
        $region23: #{tpu_custom_call.1} parent=11 // pred_region
          _
        $region24: #{tpu_custom_call.1} parent=11 // pred_fallthru
          _
        // Predicated region
        $region25: #{tpu_custom_call.1} parent=11 // pred_check
          %p218 = pneg %p126
        $region26: #{tpu_custom_call.1} parent=11 // pred_check_branch
          %220 = sbr.rel (%p218) target = $region28
        $region27: #{tpu_custom_call.1} parent=11 // pred_region
          _
        $region28: #{tpu_custom_call.1} parent=11 // pred_fallthru
          _
        // Predicated region
        $region29: #{tpu_custom_call.1} parent=11 // pred_check
          %p221 = pneg %p147
        $region30: #{tpu_custom_call.1} parent=11 // pred_check_branch
          %223 = sbr.rel (%p221) target = $region32
        $region31: #{tpu_custom_call.1} parent=11 // pred_region
          _
        $region32: #{tpu_custom_call.1} parent=11 // pred_fallthru
          _
        // Predicated region
        $region33: #{tpu_custom_call.1} parent=11 // pred_check
          %p224 = pneg %p168
        $region34: #{tpu_custom_call.1} parent=11 // pred_check_branch
          %226 = sbr.rel (%p224) target = $region36
        $region35: #{tpu_custom_call.1} parent=11 // pred_region
          _
        $region36: #{tpu_custom_call.1} parent=11 // pred_fallthru
          _
      $region12: #{tpu_custom_call.1} parent=5 // pred_fallthru
        _
      %p227 = scmp.lt.s32.totalorder %s16, 2
      // Predicated region
      $region37: #{tpu_custom_call.1} parent=5 // pred_check
        %p228 = pneg %p227
      $region38: #{tpu_custom_call.1} parent=5 // pred_check_branch
        %230 = sbr.rel (%p228) target = $region40
      $region39: #{tpu_custom_call.1} parent=5 // pred_region
        // Predicated region
        $region41: #{tpu_custom_call.1} parent=39 // pred_check
          %p231 = pneg %p36
        $region42: #{tpu_custom_call.1} parent=39 // pred_check_branch
          %233 = sbr.rel (%p231) target = $region44
        $region43: #{tpu_custom_call.1} parent=39 // pred_region
          %p234 = scmp.lt.s32.totalorder %s16, 1
          %s235 = scalar_select %p234, %s16, 1
          %s236 = smul.addr %s235, 8
          %s237 = scalar_lea.vmem %s0, %s236
        $region44: #{tpu_custom_call.1} parent=39 // pred_fallthru
          _
      $region40: #{tpu_custom_call.1} parent=5 // pred_fallthru
        _
      %p238 = scmp.le.s32.totalorder 1, %s16
      %p239 = scmp.lt.s32.totalorder %s16, 3
      %p240 = pnand %p238, %p239
      %p241 = pneg %p240
      // Predicated region
      $region45: #{tpu_custom_call.1} parent=5 // pred_check
        _
      $region46: #{tpu_custom_call.1} parent=5 // pred_check_branch
        %243 = sbr.rel (%p240) target = $region48
      $region47: #{tpu_custom_call.1} parent=5 // pred_region
        %s244 = ssub.s32 %s16, 1
        %p245 = scmp.lt.s32.totalorder %s21, 1
        %s246 = scalar_select %p245, %s21, 1
        %s247 = smul.addr %s246, 8
        %s248 = scalar_lea.vmem %s0, %s247
        %p249 = pneg %p42
        %p250 = pneg %p39
        %p251 = pneg %p63
        %p252 = pneg %p60
        %p253 = pneg %p84
        %p254 = pneg %p81
        %p255 = pneg %p105
        %p256 = pneg %p102
        %p257 = pneg %p126
        %p258 = pneg %p123
        %p259 = pneg %p147
        %p260 = pneg %p144
        %p261 = pneg %p168
        %p262 = pneg %p165
        %p263 = pneg %p194
        %p264 = pneg %p191
        %s265 = sand.u32 %s181, 1
        %s266 = scalar_lea.sflag [#allocation3], %s265
        %s267 = sand.u32 %s181, 1
        %s268 = smul.addr %s267, 8
        %s269 = scalar_lea.vmem [#allocation2], %s268
        %p270 = scmp.lt.s32.totalorder %s21, 1
        %s271 = scalar_select %p270, %s21, 1
        %s272 = smul.addr %s271, 8
        %s273 = scalar_lea.vmem %s0, %s272
        %v275 = vld [vmem:[%s273] sm:$0xff]
        %vm276 = vcmask 261120
        %v277 = vsel %vm276, %v275, 0.0
        %278 = vadd.xlane.f32.xlu0 %v277
        %v279 = vpop.xlane.xlu0 %278
        %v280 = vrcp.pop 32.0
        %v281 = vmul.f32 %v279, %v280
        %v282 = vsub.f32 %v275, %v281
        %v283 = vmul.f32 %v282, %v282
        %v284 = vsel %vm276, %v283, 0.0
        %285 = vadd.xlane.f32.xlu0 %v284
        %v286 = vpop.xlane.xlu0 %285
        %v287 = vmul.f32 %v286, %v280
        %v288 = vadd.f32 %v287, 1e-05
        %v289 = vrsqrt.pop %v288
        %v290 = vmul.f32 %v282, %v289
        %v291 = vld [vmem:[%s1] sm:$0x1]
        %v293 = vlaneseq
        %v294 = vshrl.u32 %v293, 7
        %v295 = vsub.s32 0, %v294
        %v296 = vrot.slane %v291, %v295
        %v298 = vmul.f32 %v290, %v296
        %v299 = vld [vmem:[%s2] sm:$0x1]
        %v301 = vlaneseq
        %v302 = vshrl.u32 %v301, 7
        %v303 = vsub.s32 0, %v302
        %v304 = vrot.slane %v299, %v303
        %v306 = vadd.f32 %v298, %v304
        %v307 = vpack.c.bf16 %v306, %v306
        %v308 = vld [vmem:[%s3] sm:$0xf]
        %v309 = vld [vmem:[%s3 + $0x4] sm:$0xf]
        %v310 = vld [vmem:[%s3 + $0x8] sm:$0xf]
        %v311 = vld [vmem:[%s3 + $0xc] sm:$0xf]
        %v312 = vld [vmem:[%s4] sm:$0x1]
        %v314 = vlaneseq
        %v315 = vshrl.u32 %v314, 7
        %v316 = vsub.s32 0, %v315
        %v317 = vrot.slane %v312, %v316
        %v323 = vunpack.c.l.b16 %v308
        %v324 = vunpack.c.l.b16 %v309
        %v325 = vunpack.c.l.b16 %v310
        %v326 = vunpack.c.l.b16 %v311
        %v327 = vpack.c.b16 %v324, %v323
        %v328 = vpack.c.b16 %v326, %v325
        %v332 = vsel %vm276, %v307, 0
        %334 = vmatprep.subr.bf16.mxu0 0
        %335 = vmatpush1.bf16.msra.mxu0 %v327
        %336 = vmatprep.subr.bf16.mxu0 0
        %337 = vmatpush1.bf16.msra.mxu0 %v328
        %338 = vmatprep.subr.bf16.mxu0 0
        %339 = vmatpush1.bf16.msra.mxu0 0
        %340 = vmatprep.subr.bf16.mxu0 0
        %341 = vmatpush1.bf16.msra.mxu0 0
        %342 = vmatprep.subr.bf16.mxu0 0
        %343 = vmatpush1.bf16.msra.mxu0 0
        %344 = vmatprep.subr.bf16.mxu0 0
        %345 = vmatpush1.bf16.msra.mxu0 0
        %346 = vmatprep.subr.bf16.mxu0 0
        %347 = vmatpush1.bf16.msra.mxu0 0
        %348 = vmatprep.subr.bf16.mxu0 0
        %349 = vmatpush1.bf16.msra.mxu0 0
        %350 = vmatprep.subr.bf16.mxu0 0
        %351 = vmatpush1.bf16.msra.mxu0 0
        %352 = vmatprep.subr.bf16.mxu0 0
        %353 = vmatpush1.bf16.msra.mxu0 0
        %354 = vmatprep.subr.bf16.mxu0 0
        %355 = vmatpush1.bf16.msra.mxu0 0
        %356 = vmatprep.subr.bf16.mxu0 0
        %357 = vmatpush1.bf16.msra.mxu0 0
        %358 = vmatprep.subr.bf16.mxu0 0
        %359 = vmatpush1.bf16.msra.mxu0 0
        %360 = vmatprep.subr.bf16.mxu0 0
        %361 = vmatpush1.bf16.msra.mxu0 0
        %362 = vmatprep.subr.bf16.mxu0 0
        %363 = vmatpush1.bf16.msra.mxu0 0
        %364 = vmatprep.subr.bf16.mxu0 0
        %365 = vmatpush1.bf16.msra.mxu0 0
        %366 = vmatprep.mubr.bf16.mxu0 0
        %367 = vmatmul.mubr.bf16.gmra.mrb[0].mxu0 %v332
        %v368 = vpop.f32.mrb[0].mxu0
        %v369 = vadd.f32 %v317, %v368
        %v370 = vpop.f32.mrb[0].mxu0
        %v371 = vpop.f32.mrb[0].mxu0
        %v372 = vpop.f32.mrb[0].mxu0
        %373 = vdwg.mxu0
        %v374 = vmul.f32 %v369, 0.35355338
        %376 = vrot.lane.b32.xlu0 %v374, 120
        %v377 = vpop.permute.xlu0 %376
        %379 = vrot.lane.b32.xlu0 %v374, 112
        %v380 = vpop.permute.xlu0 %379
        %382 = vrot.lane.b32.xlu0 %v374, 104
        %v383 = vpop.permute.xlu0 %382
        %v385 = vcombine.low %v374, %v380
        %v386 = vcombine.high %v374, %v380
        %v388 = vunpack.c.l.s4 1983009808
        %v389 = vunpack.c.0.s8 %v388
        %v390 = vlaneseq
        %v391 = vshrl.u32 %v390, 7
        %v392 = vsub.s32 %v389, %v391
        %v393 = vrot.slane %v385, %v392
        %v395 = vunpack.c.l.s4 1983009808
        %v396 = vunpack.c.0.s8 %v395
        %v397 = vlaneseq
        %v398 = vshrl.u32 %v397, 7
        %v399 = vsub.s32 %v396, %v398
        %v400 = vrot.slane %v386, %v399
        %v401 = vcombine.low %v377, %v383
        %v402 = vcombine.high %v377, %v383
        %v404 = vunpack.c.l.s4 1983009808
        %v405 = vunpack.c.0.s8 %v404
        %v406 = vlaneseq
        %v407 = vshrl.u32 %v406, 7
        %v408 = vsub.s32 %v405, %v407
        %v409 = vrot.slane %v401, %v408
        %v411 = vunpack.c.l.s4 1983009808
        %v412 = vunpack.c.0.s8 %v411
        %v413 = vlaneseq
        %v414 = vshrl.u32 %v413, 7
        %v415 = vsub.s32 %v412, %v414
        %v416 = vrot.slane %v402, %v415
        %v417 = vcombine.low %v393, %v409
        %v418 = vcombine.high %v393, %v409
        %v420 = vunpack.c.l.s4 1934713408
        %v421 = vunpack.c.0.s8 %v420
        %v422 = vlaneseq
        %v423 = vshrl.u32 %v422, 7
        %v424 = vsub.s32 %v421, %v423
        %v425 = vrot.slane %v417, %v424
        %v427 = vunpack.c.l.s4 1934713408
        %v428 = vunpack.c.0.s8 %v427
        %v429 = vlaneseq
        %v430 = vshrl.u32 %v429, 7
        %v431 = vsub.s32 %v428, %v430
        %v432 = vrot.slane %v418, %v431
        %v433 = vcombine.low %v400, %v416
        %v434 = vcombine.high %v400, %v416
        %v436 = vunpack.c.l.s4 1934713408
        %v437 = vunpack.c.0.s8 %v436
        %v438 = vlaneseq
        %v439 = vshrl.u32 %v438, 7
        %v440 = vsub.s32 %v437, %v439
        %v441 = vrot.slane %v433, %v440
        %v443 = vunpack.c.l.s4 1934713408
        %v444 = vunpack.c.0.s8 %v443
        %v445 = vlaneseq
        %v446 = vshrl.u32 %v445, 7
        %v447 = vsub.s32 %v444, %v446
        %v448 = vrot.slane %v434, %v447
        %v449 = vcombine.high %v425, 0.0
        %v450 = vcombine.high %v432, 0.0
        %v451 = vcombine.high %v441, 0.0
        %v452 = vcombine.high %v448, 0.0
        %v453 = vcombine.low %v425, %v432
        %v455 = vunpack.c.l.s4 1983009808
        %v456 = vunpack.c.0.s8 %v455
        %v457 = vlaneseq
        %v458 = vshrl.u32 %v457, 7
        %v459 = vsub.s32 %v456, %v458
        %v460 = vrot.slane %v453, %v459
        %v461 = vcombine.low %v449, %v450
        %v463 = vunpack.c.l.s4 1983009808
        %v464 = vunpack.c.0.s8 %v463
        %v465 = vlaneseq
        %v466 = vshrl.u32 %v465, 7
        %v467 = vsub.s32 %v464, %v466
        %v468 = vrot.slane %v461, %v467
        %v469 = vcombine.low %v441, %v448
        %v471 = vunpack.c.l.s4 1983009808
        %v472 = vunpack.c.0.s8 %v471
        %v473 = vlaneseq
        %v474 = vshrl.u32 %v473, 7
        %v475 = vsub.s32 %v472, %v474
        %v476 = vrot.slane %v469, %v475
        %v477 = vcombine.low %v451, %v452
        %v479 = vunpack.c.l.s4 1983009808
        %v480 = vunpack.c.0.s8 %v479
        %v481 = vlaneseq
        %v482 = vshrl.u32 %v481, 7
        %v483 = vsub.s32 %v480, %v482
        %v484 = vrot.slane %v477, %v483
        %v485 = vcombine.low %v460, %v468
        %v486 = vcombine.high %v460, %v468
        %v488 = vunpack.c.l.s4 1934713408
        %v489 = vunpack.c.0.s8 %v488
        %v490 = vlaneseq
        %v491 = vshrl.u32 %v490, 7
        %v492 = vsub.s32 %v489, %v491
        %v493 = vrot.slane %v485, %v492
        %v495 = vunpack.c.l.s4 1934713408
        %v496 = vunpack.c.0.s8 %v495
        %v497 = vlaneseq
        %v498 = vshrl.u32 %v497, 7
        %v499 = vsub.s32 %v496, %v498
        %v500 = vrot.slane %v486, %v499
        %v501 = vcombine.low %v476, %v484
        %v502 = vcombine.high %v476, %v484
        %v504 = vunpack.c.l.s4 1934713408
        %v505 = vunpack.c.0.s8 %v504
        %v506 = vlaneseq
        %v507 = vshrl.u32 %v506, 7
        %v508 = vsub.s32 %v505, %v507
        %v509 = vrot.slane %v501, %v508
        %v511 = vunpack.c.l.s4 1934713408
        %v512 = vunpack.c.0.s8 %v511
        %v513 = vlaneseq
        %v514 = vshrl.u32 %v513, 7
        %v515 = vsub.s32 %v512, %v514
        %v516 = vrot.slane %v502, %v515
        %v517 = vcombine.low %v493, %v509
        %v518 = vcombine.high %v493, %v509
        %v519 = vcombine.low %v500, %v516
        %v520 = vcombine.high %v500, %v516
        %v521 = vpack.c.bf16 %v517, %v517
        %v522 = vpack.c.bf16 %v518, %v518
        %v523 = vpack.c.bf16 %v519, %v519
        %v524 = vpack.c.bf16 %v520, %v520
        %526 = vrot.lane.b32.xlu0 %v369, 120
        %v527 = vpop.permute.xlu0 %526
        %528 = vrot.lane.b32.xlu0 %v369, 112
        %v529 = vpop.permute.xlu0 %528
        %530 = vrot.lane.b32.xlu0 %v369, 104
        %v531 = vpop.permute.xlu0 %530
        %532 = vrot.lane.b32.xlu0 %v369, 96
        %v533 = vpop.permute.xlu0 %532
        %534 = vrot.lane.b32.xlu0 %v527, 96
        %v535 = vpop.permute.xlu0 %534
        %536 = vrot.lane.b32.xlu0 %v529, 96
        %v537 = vpop.permute.xlu0 %536
        %538 = vrot.lane.b32.xlu0 %v531, 96
        %v539 = vpop.permute.xlu0 %538
        %v544 = vcombine.low %v533, %v537
        %v545 = vcombine.high %v533, %v537
        %v547 = vunpack.c.l.s4 1983009808
        %v548 = vunpack.c.0.s8 %v547
        %v549 = vlaneseq
        %v550 = vshrl.u32 %v549, 7
        %v551 = vsub.s32 %v548, %v550
        %v552 = vrot.slane %v544, %v551
        %v554 = vunpack.c.l.s4 1983009808
        %v555 = vunpack.c.0.s8 %v554
        %v556 = vlaneseq
        %v557 = vshrl.u32 %v556, 7
        %v558 = vsub.s32 %v555, %v557
        %v559 = vrot.slane %v545, %v558
        %v560 = vcombine.low %v535, %v539
        %v561 = vcombine.high %v535, %v539
        %v563 = vunpack.c.l.s4 1983009808
        %v564 = vunpack.c.0.s8 %v563
        %v565 = vlaneseq
        %v566 = vshrl.u32 %v565, 7
        %v567 = vsub.s32 %v564, %v566
        %v568 = vrot.slane %v560, %v567
        %v570 = vunpack.c.l.s4 1983009808
        %v571 = vunpack.c.0.s8 %v570
        %v572 = vlaneseq
        %v573 = vshrl.u32 %v572, 7
        %v574 = vsub.s32 %v571, %v573
        %v575 = vrot.slane %v561, %v574
        %v576 = vcombine.low %v552, %v568
        %v577 = vcombine.high %v552, %v568
        %v579 = vunpack.c.l.s4 1934713408
        %v580 = vunpack.c.0.s8 %v579
        %v581 = vlaneseq
        %v582 = vshrl.u32 %v581, 7
        %v583 = vsub.s32 %v580, %v582
        %v584 = vrot.slane %v576, %v583
        %v586 = vunpack.c.l.s4 1934713408
        %v587 = vunpack.c.0.s8 %v586
        %v588 = vlaneseq
        %v589 = vshrl.u32 %v588, 7
        %v590 = vsub.s32 %v587, %v589
        %v591 = vrot.slane %v577, %v590
        %v592 = vcombine.low %v559, %v575
        %v593 = vcombine.high %v559, %v575
        %v595 = vunpack.c.l.s4 1934713408
        %v596 = vunpack.c.0.s8 %v595
        %v597 = vlaneseq
        %v598 = vshrl.u32 %v597, 7
        %v599 = vsub.s32 %v596, %v598
        %v600 = vrot.slane %v592, %v599
        %v602 = vunpack.c.l.s4 1934713408
        %v603 = vunpack.c.0.s8 %v602
        %v604 = vlaneseq
        %v605 = vshrl.u32 %v604, 7
        %v606 = vsub.s32 %v603, %v605
        %v607 = vrot.slane %v593, %v606
        %v608 = vcombine.high %v584, 0.0
        %v609 = vcombine.high %v591, 0.0
        %v610 = vcombine.high %v600, 0.0
        %v611 = vcombine.high %v607, 0.0
        %v612 = vcombine.low %v584, %v591
        %v614 = vunpack.c.l.s4 1983009808
        %v615 = vunpack.c.0.s8 %v614
        %v616 = vlaneseq
        %v617 = vshrl.u32 %v616, 7
        %v618 = vsub.s32 %v615, %v617
        %v619 = vrot.slane %v612, %v618
        %v620 = vcombine.low %v608, %v609
        %v622 = vunpack.c.l.s4 1983009808
        %v623 = vunpack.c.0.s8 %v622
        %v624 = vlaneseq
        %v625 = vshrl.u32 %v624, 7
        %v626 = vsub.s32 %v623, %v625
        %v627 = vrot.slane %v620, %v626
        %v628 = vcombine.low %v600, %v607
        %v630 = vunpack.c.l.s4 1983009808
        %v631 = vunpack.c.0.s8 %v630
        %v632 = vlaneseq
        %v633 = vshrl.u32 %v632, 7
        %v634 = vsub.s32 %v631, %v633
        %v635 = vrot.slane %v628, %v634
        %v636 = vcombine.low %v610, %v611
        %v638 = vunpack.c.l.s4 1983009808
        %v639 = vunpack.c.0.s8 %v638
        %v640 = vlaneseq
        %v641 = vshrl.u32 %v640, 7
        %v642 = vsub.s32 %v639, %v641
        %v643 = vrot.slane %v636, %v642
        %v644 = vcombine.low %v619, %v627
        %v645 = vcombine.high %v619, %v627
        %v647 = vunpack.c.l.s4 1934713408
        %v648 = vunpack.c.0.s8 %v647
        %v649 = vlaneseq
        %v650 = vshrl.u32 %v649, 7
        %v651 = vsub.s32 %v648, %v650
        %v652 = vrot.slane %v644, %v651
        %v654 = vunpack.c.l.s4 1934713408
        %v655 = vunpack.c.0.s8 %v654
        %v656 = vlaneseq
        %v657 = vshrl.u32 %v656, 7
        %v658 = vsub.s32 %v655, %v657
        %v659 = vrot.slane %v645, %v658
        %v660 = vcombine.low %v635, %v643
        %v661 = vcombine.high %v635, %v643
        %v663 = vunpack.c.l.s4 1934713408
        %v664 = vunpack.c.0.s8 %v663
        %v665 = vlaneseq
        %v666 = vshrl.u32 %v665, 7
        %v667 = vsub.s32 %v664, %v666
        %v668 = vrot.slane %v660, %v667
        %v670 = vunpack.c.l.s4 1934713408
        %v671 = vunpack.c.0.s8 %v670
        %v672 = vlaneseq
        %v673 = vshrl.u32 %v672, 7
        %v674 = vsub.s32 %v671, %v673
        %v675 = vrot.slane %v661, %v674
        %v676 = vcombine.low %v652, %v668
        %v677 = vcombine.high %v652, %v668
        %v678 = vcombine.low %v659, %v675
        %v679 = vcombine.high %v659, %v675
        %v680 = vpack.c.bf16 %v676, %v676
        %v681 = vpack.c.bf16 %v677, %v677
        %v682 = vpack.c.bf16 %v678, %v678
        %v683 = vpack.c.bf16 %v679, %v679
        %684 = vrot.lane.b32.xlu0 %v369, 64
        %v685 = vpop.permute.xlu0 %684
        %686 = vrot.lane.b32.xlu0 %v527, 64
        %v687 = vpop.permute.xlu0 %686
        %688 = vrot.lane.b32.xlu0 %v529, 64
        %v689 = vpop.permute.xlu0 %688
        %690 = vrot.lane.b32.xlu0 %v531, 64
        %v691 = vpop.permute.xlu0 %690
        %v696 = vcombine.low %v685, %v689
        %v697 = vcombine.high %v685, %v689
        %v699 = vunpack.c.l.s4 1983009808
        %v700 = vunpack.c.0.s8 %v699
        %v701 = vlaneseq
        %v702 = vshrl.u32 %v701, 7
        %v703 = vsub.s32 %v700, %v702
        %v704 = vrot.slane %v696, %v703
        %v706 = vunpack.c.l.s4 1983009808
        %v707 = vunpack.c.0.s8 %v706
        %v708 = vlaneseq
        %v709 = vshrl.u32 %v708, 7
        %v710 = vsub.s32 %v707, %v709
        %v711 = vrot.slane %v697, %v710
        %v712 = vcombine.low %v687, %v691
        %v713 = vcombine.high %v687, %v691
        %v715 = vunpack.c.l.s4 1983009808
        %v716 = vunpack.c.0.s8 %v715
        %v717 = vlaneseq
        %v718 = vshrl.u32 %v717, 7
        %v719 = vsub.s32 %v716, %v718
        %v720 = vrot.slane %v712, %v719
        %v722 = vunpack.c.l.s4 1983009808
        %v723 = vunpack.c.0.s8 %v722
        %v724 = vlaneseq
        %v725 = vshrl.u32 %v724, 7
        %v726 = vsub.s32 %v723, %v725
        %v727 = vrot.slane %v713, %v726
        %v728 = vcombine.low %v704, %v720
        %v729 = vcombine.high %v704, %v720
        %v731 = vunpack.c.l.s4 1934713408
        %v732 = vunpack.c.0.s8 %v731
        %v733 = vlaneseq
        %v734 = vshrl.u32 %v733, 7
        %v735 = vsub.s32 %v732, %v734
        %v736 = vrot.slane %v728, %v735
        %v738 = vunpack.c.l.s4 1934713408
        %v739 = vunpack.c.0.s8 %v738
        %v740 = vlaneseq
        %v741 = vshrl.u32 %v740, 7
        %v742 = vsub.s32 %v739, %v741
        %v743 = vrot.slane %v729, %v742
        %v744 = vcombine.low %v711, %v727
        %v745 = vcombine.high %v711, %v727
        %v747 = vunpack.c.l.s4 1934713408
        %v748 = vunpack.c.0.s8 %v747
        %v749 = vlaneseq
        %v750 = vshrl.u32 %v749, 7
        %v751 = vsub.s32 %v748, %v750
        %v752 = vrot.slane %v744, %v751
        %v754 = vunpack.c.l.s4 1934713408
        %v755 = vunpack.c.0.s8 %v754
        %v756 = vlaneseq
        %v757 = vshrl.u32 %v756, 7
        %v758 = vsub.s32 %v755, %v757
        %v759 = vrot.slane %v745, %v758
        %v760 = vcombine.high %v736, 0.0
        %v761 = vcombine.high %v743, 0.0
        %v762 = vcombine.high %v752, 0.0
        %v763 = vcombine.high %v759, 0.0
        %v764 = vcombine.low %v736, %v743
        %v766 = vunpack.c.l.s4 1983009808
        %v767 = vunpack.c.0.s8 %v766
        %v768 = vlaneseq
        %v769 = vshrl.u32 %v768, 7
        %v770 = vsub.s32 %v767, %v769
        %v771 = vrot.slane %v764, %v770
        %v772 = vcombine.low %v760, %v761
        %v774 = vunpack.c.l.s4 1983009808
        %v775 = vunpack.c.0.s8 %v774
        %v776 = vlaneseq
        %v777 = vshrl.u32 %v776, 7
        %v778 = vsub.s32 %v775, %v777
        %v779 = vrot.slane %v772, %v778
        %v780 = vcombine.low %v752, %v759
        %v782 = vunpack.c.l.s4 1983009808
        %v783 = vunpack.c.0.s8 %v782
        %v784 = vlaneseq
        %v785 = vshrl.u32 %v784, 7
        %v786 = vsub.s32 %v783, %v785
        %v787 = vrot.slane %v780, %v786
        %v788 = vcombine.low %v762, %v763
        %v790 = vunpack.c.l.s4 1983009808
        %v791 = vunpack.c.0.s8 %v790
        %v792 = vlaneseq
        %v793 = vshrl.u32 %v792, 7
        %v794 = vsub.s32 %v791, %v793
        %v795 = vrot.slane %v788, %v794
        %v796 = vcombine.low %v771, %v779
        %v797 = vcombine.high %v771, %v779
        %v799 = vunpack.c.l.s4 1934713408
        %v800 = vunpack.c.0.s8 %v799
        %v801 = vlaneseq
        %v802 = vshrl.u32 %v801, 7
        %v803 = vsub.s32 %v800, %v802
        %v804 = vrot.slane %v796, %v803
        %v806 = vunpack.c.l.s4 1934713408
        %v807 = vunpack.c.0.s8 %v806
        %v808 = vlaneseq
        %v809 = vshrl.u32 %v808, 7
        %v810 = vsub.s32 %v807, %v809
        %v811 = vrot.slane %v797, %v810
        %v812 = vcombine.low %v787, %v795
        %v813 = vcombine.high %v787, %v795
        %v815 = vunpack.c.l.s4 1934713408
        %v816 = vunpack.c.0.s8 %v815
        %v817 = vlaneseq
        %v818 = vshrl.u32 %v817, 7
        %v819 = vsub.s32 %v816, %v818
        %v820 = vrot.slane %v812, %v819
        %v822 = vunpack.c.l.s4 1934713408
        %v823 = vunpack.c.0.s8 %v822
        %v824 = vlaneseq
        %v825 = vshrl.u32 %v824, 7
        %v826 = vsub.s32 %v823, %v825
        %v827 = vrot.slane %v813, %v826
        %v828 = vcombine.low %v804, %v820
        %v829 = vcombine.high %v804, %v820
        %v830 = vcombine.low %v811, %v827
        %v831 = vcombine.high %v811, %v827
        %v832 = vpack.c.bf16 %v828, %v828
        %v833 = vpack.c.bf16 %v829, %v829
        %v834 = vpack.c.bf16 %v830, %v830
        %v835 = vpack.c.bf16 %v831, %v831
        %vm836 = vcmask 64512
        %v838 = vsel %vm836, %v521, 0
        %v841 = vsel %vm836, %v680, 0
        %843 = vmatprep.subr.bf16.mxu0 0
        %844 = vmatpush1.bf16.xpose.msra.mxu0 %v841
        %845 = vmatprep.subr.bf16.mxu0 0
        %846 = vmatpush1.bf16.xpose.msra.mxu0 0
        %847 = vmatprep.subr.bf16.mxu0 0
        %848 = vmatpush1.bf16.xpose.msra.mxu0 0
        %849 = vmatprep.subr.bf16.mxu0 0
        %850 = vmatpush1.bf16.xpose.msra.mxu0 0
        %851 = vmatprep.subr.bf16.mxu0 0
        %852 = vmatpush1.bf16.xpose.msra.mxu0 0
        %853 = vmatprep.subr.bf16.mxu0 0
        %854 = vmatpush1.bf16.xpose.msra.mxu0 0
        %855 = vmatprep.subr.bf16.mxu0 0
        %856 = vmatpush1.bf16.xpose.msra.mxu0 0
        %857 = vmatprep.subr.bf16.mxu0 0
        %858 = vmatpush1.bf16.xpose.msra.mxu0 0
        %859 = vmatprep.subr.bf16.mxu0 0
        %860 = vmatpush1.bf16.xpose.msra.mxu0 0
        %861 = vmatprep.subr.bf16.mxu0 0
        %862 = vmatpush1.bf16.xpose.msra.mxu0 0
        %863 = vmatprep.subr.bf16.mxu0 0
        %864 = vmatpush1.bf16.xpose.msra.mxu0 0
        %865 = vmatprep.subr.bf16.mxu0 0
        %866 = vmatpush1.bf16.xpose.msra.mxu0 0
        %867 = vmatprep.subr.bf16.mxu0 0
        %868 = vmatpush1.bf16.xpose.msra.mxu0 0
        %869 = vmatprep.subr.bf16.mxu0 0
        %870 = vmatpush1.bf16.xpose.msra.mxu0 0
        %871 = vmatprep.subr.bf16.mxu0 0
        %872 = vmatpush1.bf16.xpose.msra.mxu0 0
        %873 = vmatprep.subr.bf16.mxu0 0
        %874 = vmatpush1.bf16.xpose.msra.mxu0 0
        %875 = vmatprep.mubr.bf16.mxu0 0
        %876 = vmatmul.mubr.bf16.gmra.mrb[0].mxu0 %v838
        %v877 = vpop.f32.mrb[0].mxu0
        %v878 = vadd.f32 0.0, %v877
        %v879 = vpop.f32.mrb[0].mxu0
        %v880 = vpop.f32.mrb[0].mxu0
        %v881 = vpop.f32.mrb[0].mxu0
        %882 = vdwg.mxu0
        %v884 = vsel %vm836, %v522, 0
        %v887 = vsel %vm836, %v681, 0
        %889 = vmatprep.subr.bf16.mxu0 0
        %890 = vmatpush1.bf16.xpose.msra.mxu0 %v887
        %891 = vmatprep.subr.bf16.mxu0 0
        %892 = vmatpush1.bf16.xpose.msra.mxu0 0
        %893 = vmatprep.subr.bf16.mxu0 0
        %894 = vmatpush1.bf16.xpose.msra.mxu0 0
        %895 = vmatprep.subr.bf16.mxu0 0
        %896 = vmatpush1.bf16.xpose.msra.mxu0 0
        %897 = vmatprep.subr.bf16.mxu0 0
        %898 = vmatpush1.bf16.xpose.msra.mxu0 0
        %899 = vmatprep.subr.bf16.mxu0 0
        %900 = vmatpush1.bf16.xpose.msra.mxu0 0
        %901 = vmatprep.subr.bf16.mxu0 0
        %902 = vmatpush1.bf16.xpose.msra.mxu0 0
        %903 = vmatprep.subr.bf16.mxu0 0
        %904 = vmatpush1.bf16.xpose.msra.mxu0 0
        %905 = vmatprep.subr.bf16.mxu0 0
        %906 = vmatpush1.bf16.xpose.msra.mxu0 0
        %907 = vmatprep.subr.bf16.mxu0 0
        %908 = vmatpush1.bf16.xpose.msra.mxu0 0
        %909 = vmatprep.subr.bf16.mxu0 0
        %910 = vmatpush1.bf16.xpose.msra.mxu0 0
        %911 = vmatprep.subr.bf16.mxu0 0
        %912 = vmatpush1.bf16.xpose.msra.mxu0 0
        %913 = vmatprep.subr.bf16.mxu0 0
        %914 = vmatpush1.bf16.xpose.msra.mxu0 0
        %915 = vmatprep.subr.bf16.mxu0 0
        %916 = vmatpush1.bf16.xpose.msra.mxu0 0
        %917 = vmatprep.subr.bf16.mxu0 0
        %918 = vmatpush1.bf16.xpose.msra.mxu0 0
        %919 = vmatprep.subr.bf16.mxu0 0
        %920 = vmatpush1.bf16.xpose.msra.mxu0 0
        %921 = vmatprep.mubr.bf16.mxu0 0
        %922 = vmatmul.mubr.bf16.gmra.mrb[0].mxu0 %v884
        %v923 = vpop.f32.mrb[0].mxu0
        %v924 = vadd.f32 0.0, %v923
        %v925 = vpop.f32.mrb[0].mxu0
        %v926 = vpop.f32.mrb[0].mxu0
        %v927 = vpop.f32.mrb[0].mxu0
        %928 = vdwg.mxu0
        %v930 = vsel %vm836, %v523, 0
        %v933 = vsel %vm836, %v682, 0
        %935 = vmatprep.subr.bf16.mxu0 0
        %936 = vmatpush1.bf16.xpose.msra.mxu0 %v933
        %937 = vmatprep.subr.bf16.mxu0 0
        %938 = vmatpush1.bf16.xpose.msra.mxu0 0
        %939 = vmatprep.subr.bf16.mxu0 0
        %940 = vmatpush1.bf16.xpose.msra.mxu0 0
        %941 = vmatprep.subr.bf16.mxu0 0
        %942 = vmatpush1.bf16.xpose.msra.mxu0 0
        %943 = vmatprep.subr.bf16.mxu0 0
        %944 = vmatpush1.bf16.xpose.msra.mxu0 0
        %945 = vmatprep.subr.bf16.mxu0 0
        %946 = vmatpush1.bf16.xpose.msra.mxu0 0
        %947 = vmatprep.subr.bf16.mxu0 0
        %948 = vmatpush1.bf16.xpose.msra.mxu0 0
        %949 = vmatprep.subr.bf16.mxu0 0
        %950 = vmatpush1.bf16.xpose.msra.mxu0 0
        %951 = vmatprep.subr.bf16.mxu0 0
        %952 = vmatpush1.bf16.xpose.msra.mxu0 0
        %953 = vmatprep.subr.bf16.mxu0 0
        %954 = vmatpush1.bf16.xpose.msra.mxu0 0
        %955 = vmatprep.subr.bf16.mxu0 0
        %956 = vmatpush1.bf16.xpose.msra.mxu0 0
        %957 = vmatprep.subr.bf16.mxu0 0
        %958 = vmatpush1.bf16.xpose.msra.mxu0 0
        %959 = vmatprep.subr.bf16.mxu0 0
        %960 = vmatpush1.bf16.xpose.msra.mxu0 0
        %961 = vmatprep.subr.bf16.mxu0 0
        %962 = vmatpush1.bf16.xpose.msra.mxu0 0
        %963 = vmatprep.subr.bf16.mxu0 0
        %964 = vmatpush1.bf16.xpose.msra.mxu0 0
        %965 = vmatprep.subr.bf16.mxu0 0
        %966 = vmatpush1.bf16.xpose.msra.mxu0 0
        %967 = vmatprep.mubr.bf16.mxu0 0
        %968 = vmatmul.mubr.bf16.gmra.mrb[0].mxu0 %v930
        %v969 = vpop.f32.mrb[0].mxu0
        %v970 = vadd.f32 0.0, %v969
        %v971 = vpop.f32.mrb[0].mxu0
        %v972 = vpop.f32.mrb[0].mxu0
        %v973 = vpop.f32.mrb[0].mxu0
        %974 = vdwg.mxu0
        %v976 = vsel %vm836, %v524, 0
        %v979 = vsel %vm836, %v683, 0
        %981 = vmatprep.subr.bf16.mxu0 0
        %982 = vmatpush1.bf16.xpose.msra.mxu0 %v979
        %983 = vmatprep.subr.bf16.mxu0 0
        %984 = vmatpush1.bf16.xpose.msra.mxu0 0
        %985 = vmatprep.subr.bf16.mxu0 0
        %986 = vmatpush1.bf16.xpose.msra.mxu0 0
        %987 = vmatprep.subr.bf16.mxu0 0
        %988 = vmatpush1.bf16.xpose.msra.mxu0 0
        %989 = vmatprep.subr.bf16.mxu0 0
        %990 = vmatpush1.bf16.xpose.msra.mxu0 0
        %991 = vmatprep.subr.bf16.mxu0 0
        %992 = vmatpush1.bf16.xpose.msra.mxu0 0
        %993 = vmatprep.subr.bf16.mxu0 0
        %994 = vmatpush1.bf16.xpose.msra.mxu0 0
        %995 = vmatprep.subr.bf16.mxu0 0
        %996 = vmatpush1.bf16.xpose.msra.mxu0 0
        %997 = vmatprep.subr.bf16.mxu0 0
        %998 = vmatpush1.bf16.xpose.msra.mxu0 0
        %999 = vmatprep.subr.bf16.mxu0 0
        %1000 = vmatpush1.bf16.xpose.msra.mxu0 0
        %1001 = vmatprep.subr.bf16.mxu0 0
        %1002 = vmatpush1.bf16.xpose.msra.mxu0 0
        %1003 = vmatprep.subr.bf16.mxu0 0
        %1004 = vmatpush1.bf16.xpose.msra.mxu0 0
        %1005 = vmatprep.subr.bf16.mxu0 0
        %1006 = vmatpush1.bf16.xpose.msra.mxu0 0
        %1007 = vmatprep.subr.bf16.mxu0 0
        %1008 = vmatpush1.bf16.xpose.msra.mxu0 0
        %1009 = vmatprep.subr.bf16.mxu0 0
        %1010 = vmatpush1.bf16.xpose.msra.mxu0 0
        %1011 = vmatprep.subr.bf16.mxu0 0
        %1012 = vmatpush1.bf16.xpose.msra.mxu0 0
        %1013 = vmatprep.mubr.bf16.mxu0 0
        %1014 = vmatmul.mubr.bf16.gmra.mrb[0].mxu0 %v976
        %v1015 = vpop.f32.mrb[0].mxu0
        %v1016 = vadd.f32 0.0, %v1015
        %v1017 = vpop.f32.mrb[0].mxu0
        %v1018 = vpop.f32.mrb[0].mxu0
        %v1019 = vpop.f32.mrb[0].mxu0
        %1020 = vdwg.mxu0
        %v1021 = vsel %vm836, %v878, -inf
        %1022 = vmax.xlane.f32.xlu0 %v1021
        %v1023 = vpop.xlane.xlu0 %1022
        %v1024 = vsel %vm836, %v924, -inf
        %1025 = vmax.xlane.f32.xlu0 %v1024
        %v1026 = vpop.xlane.xlu0 %1025
        %v1027 = vsel %vm836, %v970, -inf
        %1028 = vmax.xlane.f32.xlu0 %v1027
        %v1029 = vpop.xlane.xlu0 %1028
        %v1030 = vsel %vm836, %v1016, -inf
        %1031 = vmax.xlane.f32.xlu0 %v1030
        %v1032 = vpop.xlane.xlu0 %1031
        %v1033 = vsub.f32 %v878, %v1023
        %v1034 = vsub.f32 %v924, %v1026
        %v1035 = vsub.f32 %v970, %v1029
        %v1036 = vsub.f32 %v1016, %v1032
        %v1037 = vmul.f32 %v1033, 1.442695
        %v1038 = vpow.pop %v1037
        %v1039 = vmul.f32 %v1034, 1.442695
        %v1040 = vpow.pop %v1039
        %v1041 = vmul.f32 %v1035, 1.442695
        %v1042 = vpow.pop %v1041
        %v1043 = vmul.f32 %v1036, 1.442695
        %v1044 = vpow.pop %v1043
        %v1045 = vsel %vm836, %v1038, 0.0
        %1046 = vadd.xlane.f32.xlu0 %v1045
        %v1047 = vpop.xlane.xlu0 %1046
        %v1048 = vsel %vm836, %v1040, 0.0
        %1049 = vadd.xlane.f32.xlu0 %v1048
        %v1050 = vpop.xlane.xlu0 %1049
        %v1051 = vsel %vm836, %v1042, 0.0
        %1052 = vadd.xlane.f32.xlu0 %v1051
        %v1053 = vpop.xlane.xlu0 %1052
        %v1054 = vsel %vm836, %v1044, 0.0
        %1055 = vadd.xlane.f32.xlu0 %v1054
        %v1056 = vpop.xlane.xlu0 %1055
        %v1057 = vrcp.pop %v1047
        %v1058 = vrcp.pop %v1050
        %v1059 = vrcp.pop %v1053
        %v1060 = vrcp.pop %v1056
        %v1061 = vmul.f32 %v1038, %v1057
        %v1062 = vmul.f32 %v1040, %v1058
        %v1063 = vmul.f32 %v1042, %v1059
        %v1064 = vmul.f32 %v1044, %v1060
        %v1065 = vpack.c.bf16 %v1061, %v1061
        %v1066 = vpack.c.bf16 %v1062, %v1062
        %v1067 = vpack.c.bf16 %v1063, %v1063
        %v1068 = vpack.c.bf16 %v1064, %v1064
        %v1070 = vsel %vm836, %v1065, 0
        %vm1072 = vcmask 1043456
        %v1074 = vsel %vm1072, %v832, 0
        %1076 = vmatprep.subr.bf16.mxu0 0
        %1077 = vmatpush1.bf16.msra.mxu0 %v1074
        %1078 = vmatprep.subr.bf16.mxu0 0
        %1079 = vmatpush1.bf16.msra.mxu0 0
        %1080 = vmatprep.subr.bf16.mxu0 0
        %1081 = vmatpush1.bf16.msra.mxu0 0
        %1082 = vmatprep.subr.bf16.mxu0 0
        %1083 = vmatpush1.bf16.msra.mxu0 0
        %1084 = vmatprep.subr.bf16.mxu0 0
        %1085 = vmatpush1.bf16.msra.mxu0 0
        %1086 = vmatprep.subr.bf16.mxu0 0
        %1087 = vmatpush1.bf16.msra.mxu0 0
        %1088 = vmatprep.subr.bf16.mxu0 0
        %1089 = vmatpush1.bf16.msra.mxu0 0
        %1090 = vmatprep.subr.bf16.mxu0 0
        %1091 = vmatpush1.bf16.msra.mxu0 0
        %1092 = vmatprep.subr.bf16.mxu0 0
        %1093 = vmatpush1.bf16.msra.mxu0 0
        %1094 = vmatprep.subr.bf16.mxu0 0
        %1095 = vmatpush1.bf16.msra.mxu0 0
        %1096 = vmatprep.subr.bf16.mxu0 0
        %1097 = vmatpush1.bf16.msra.mxu0 0
        %1098 = vmatprep.subr.bf16.mxu0 0
        %1099 = vmatpush1.bf16.msra.mxu0 0
        %1100 = vmatprep.subr.bf16.mxu0 0
        %1101 = vmatpush1.bf16.msra.mxu0 0
        %1102 = vmatprep.subr.bf16.mxu0 0
        %1103 = vmatpush1.bf16.msra.mxu0 0
        %1104 = vmatprep.subr.bf16.mxu0 0
        %1105 = vmatpush1.bf16.msra.mxu0 0
        %1106 = vmatprep.subr.bf16.mxu0 0
        %1107 = vmatpush1.bf16.msra.mxu0 0
        %1108 = vmatprep.mubr.bf16.mxu0 0
        %1109 = vmatmul.mubr.bf16.gmra.mrb[0].mxu0 %v1070
        %v1110 = vpop.f32.mrb[0].mxu0
        %v1111 = vadd.f32 0.0, %v1110
        %v1112 = vpop.f32.mrb[0].mxu0
        %v1113 = vpop.f32.mrb[0].mxu0
        %v1114 = vpop.f32.mrb[0].mxu0
        %1115 = vdwg.mxu0
        %v1117 = vsel %vm836, %v1066, 0
        %v1120 = vsel %vm1072, %v833, 0
        %1122 = vmatprep.subr.bf16.mxu0 0
        %1123 = vmatpush1.bf16.msra.mxu0 %v1120
        %1124 = vmatprep.subr.bf16.mxu0 0
        %1125 = vmatpush1.bf16.msra.mxu0 0
        %1126 = vmatprep.subr.bf16.mxu0 0
        %1127 = vmatpush1.bf16.msra.mxu0 0
        %1128 = vmatprep.subr.bf16.mxu0 0
        %1129 = vmatpush1.bf16.msra.mxu0 0
        %1130 = vmatprep.subr.bf16.mxu0 0
        %1131 = vmatpush1.bf16.msra.mxu0 0
        %1132 = vmatprep.subr.bf16.mxu0 0
        %1133 = vmatpush1.bf16.msra.mxu0 0
        %1134 = vmatprep.subr.bf16.mxu0 0
        %1135 = vmatpush1.bf16.msra.mxu0 0
        %1136 = vmatprep.subr.bf16.mxu0 0
        %1137 = vmatpush1.bf16.msra.mxu0 0
        %1138 = vmatprep.subr.bf16.mxu0 0
        %1139 = vmatpush1.bf16.msra.mxu0 0
        %1140 = vmatprep.subr.bf16.mxu0 0
        %1141 = vmatpush1.bf16.msra.mxu0 0
        %1142 = vmatprep.subr.bf16.mxu0 0
        %1143 = vmatpush1.bf16.msra.mxu0 0
        %1144 = vmatprep.subr.bf16.mxu0 0
        %1145 = vmatpush1.bf16.msra.mxu0 0
        %1146 = vmatprep.subr.bf16.mxu0 0
        %1147 = vmatpush1.bf16.msra.mxu0 0
        %1148 = vmatprep.subr.bf16.mxu0 0
        %1149 = vmatpush1.bf16.msra.mxu0 0
        %1150 = vmatprep.subr.bf16.mxu0 0
        %1151 = vmatpush1.bf16.msra.mxu0 0
        %1152 = vmatprep.subr.bf16.mxu0 0
        %1153 = vmatpush1.bf16.msra.mxu0 0
        %1154 = vmatprep.mubr.bf16.mxu0 0
        %1155 = vmatmul.mubr.bf16.gmra.mrb[0].mxu0 %v1117
        %v1156 = vpop.f32.mrb[0].mxu0
        %v1157 = vadd.f32 0.0, %v1156
        %v1158 = vpop.f32.mrb[0].mxu0
        %v1159 = vpop.f32.mrb[0].mxu0
        %v1160 = vpop.f32.mrb[0].mxu0
        %1161 = vdwg.mxu0
        %v1163 = vsel %vm836, %v1067, 0
        %v1166 = vsel %vm1072, %v834, 0
        %1168 = vmatprep.subr.bf16.mxu0 0
        %1169 = vmatpush1.bf16.msra.mxu0 %v1166
        %1170 = vmatprep.subr.bf16.mxu0 0
        %1171 = vmatpush1.bf16.msra.mxu0 0
        %1172 = vmatprep.subr.bf16.mxu0 0
        %1173 = vmatpush1.bf16.msra.mxu0 0
        %1174 = vmatprep.subr.bf16.mxu0 0
        %1175 = vmatpush1.bf16.msra.mxu0 0
        %1176 = vmatprep.subr.bf16.mxu0 0
        %1177 = vmatpush1.bf16.msra.mxu0 0
        %1178 = vmatprep.subr.bf16.mxu0 0
        %1179 = vmatpush1.bf16.msra.mxu0 0
        %1180 = vmatprep.subr.bf16.mxu0 0
        %1181 = vmatpush1.bf16.msra.mxu0 0
        %1182 = vmatprep.subr.bf16.mxu0 0
        %1183 = vmatpush1.bf16.msra.mxu0 0
        %1184 = vmatprep.subr.bf16.mxu0 0
        %1185 = vmatpush1.bf16.msra.mxu0 0
        %1186 = vmatprep.subr.bf16.mxu0 0
        %1187 = vmatpush1.bf16.msra.mxu0 0
        %1188 = vmatprep.subr.bf16.mxu0 0
        %1189 = vmatpush1.bf16.msra.mxu0 0
        %1190 = vmatprep.subr.bf16.mxu0 0
        %1191 = vmatpush1.bf16.msra.mxu0 0
        %1192 = vmatprep.subr.bf16.mxu0 0
        %1193 = vmatpush1.bf16.msra.mxu0 0
        %1194 = vmatprep.subr.bf16.mxu0 0
        %1195 = vmatpush1.bf16.msra.mxu0 0
        %1196 = vmatprep.subr.bf16.mxu0 0
        %1197 = vmatpush1.bf16.msra.mxu0 0
        %1198 = vmatprep.subr.bf16.mxu0 0
        %1199 = vmatpush1.bf16.msra.mxu0 0
        %1200 = vmatprep.mubr.bf16.mxu0 0
        %1201 = vmatmul.mubr.bf16.gmra.mrb[0].mxu0 %v1163
        %v1202 = vpop.f32.mrb[0].mxu0
        %v1203 = vadd.f32 0.0, %v1202
        %v1204 = vpop.f32.mrb[0].mxu0
        %v1205 = vpop.f32.mrb[0].mxu0
        %v1206 = vpop.f32.mrb[0].mxu0
        %1207 = vdwg.mxu0
        %v1209 = vsel %vm836, %v1068, 0
        %v1212 = vsel %vm1072, %v835, 0
        %1214 = vmatprep.subr.bf16.mxu0 0
        %1215 = vmatpush1.bf16.msra.mxu0 %v1212
        %1216 = vmatprep.subr.bf16.mxu0 0
        %1217 = vmatpush1.bf16.msra.mxu0 0
        %1218 = vmatprep.subr.bf16.mxu0 0
        %1219 = vmatpush1.bf16.msra.mxu0 0
        %1220 = vmatprep.subr.bf16.mxu0 0
        %1221 = vmatpush1.bf16.msra.mxu0 0
        %1222 = vmatprep.subr.bf16.mxu0 0
        %1223 = vmatpush1.bf16.msra.mxu0 0
        %1224 = vmatprep.subr.bf16.mxu0 0
        %1225 = vmatpush1.bf16.msra.mxu0 0
        %1226 = vmatprep.subr.bf16.mxu0 0
        %1227 = vmatpush1.bf16.msra.mxu0 0
        %1228 = vmatprep.subr.bf16.mxu0 0
        %1229 = vmatpush1.bf16.msra.mxu0 0
        %1230 = vmatprep.subr.bf16.mxu0 0
        %1231 = vmatpush1.bf16.msra.mxu0 0
        %1232 = vmatprep.subr.bf16.mxu0 0
        %1233 = vmatpush1.bf16.msra.mxu0 0
        %1234 = vmatprep.subr.bf16.mxu0 0
        %1235 = vmatpush1.bf16.msra.mxu0 0
        %1236 = vmatprep.subr.bf16.mxu0 0
        %1237 = vmatpush1.bf16.msra.mxu0 0
        %1238 = vmatprep.subr.bf16.mxu0 0
        %1239 = vmatpush1.bf16.msra.mxu0 0
        %1240 = vmatprep.subr.bf16.mxu0 0
        %1241 = vmatpush1.bf16.msra.mxu0 0
        %1242 = vmatprep.subr.bf16.mxu0 0
        %1243 = vmatpush1.bf16.msra.mxu0 0
        %1244 = vmatprep.subr.bf16.mxu0 0
        %1245 = vmatpush1.bf16.msra.mxu0 0
        %1246 = vmatprep.mubr.bf16.mxu0 0
        %1247 = vmatmul.mubr.bf16.gmra.mrb[0].mxu0 %v1209
        %v1248 = vpop.f32.mrb[0].mxu0
        %v1249 = vadd.f32 0.0, %v1248
        %v1250 = vpop.f32.mrb[0].mxu0
        %v1251 = vpop.f32.mrb[0].mxu0
        %v1252 = vpop.f32.mrb[0].mxu0
        %1253 = vdwg.mxu0
        %v1254 = vcombine.low %v1111, %v1203
        %v1255 = vcombine.high %v1111, %v1203
        %v1257 = vunpack.c.l.s4 1983009808
        %v1258 = vunpack.c.0.s8 %v1257
        %v1259 = vlaneseq
        %v1260 = vshrl.u32 %v1259, 7
        %v1261 = vsub.s32 %v1258, %v1260
        %v1262 = vrot.slane %v1254, %v1261
        %v1264 = vunpack.c.l.s4 1983009808
        %v1265 = vunpack.c.0.s8 %v1264
        %v1266 = vlaneseq
        %v1267 = vshrl.u32 %v1266, 7
        %v1268 = vsub.s32 %v1265, %v1267
        %v1269 = vrot.slane %v1255, %v1268
        %v1270 = vcombine.low %v1157, %v1249
        %v1271 = vcombine.high %v1157, %v1249
        %v1273 = vunpack.c.l.s4 1983009808
        %v1274 = vunpack.c.0.s8 %v1273
        %v1275 = vlaneseq
        %v1276 = vshrl.u32 %v1275, 7
        %v1277 = vsub.s32 %v1274, %v1276
        %v1278 = vrot.slane %v1270, %v1277
        %v1280 = vunpack.c.l.s4 1983009808
        %v1281 = vunpack.c.0.s8 %v1280
        %v1282 = vlaneseq
        %v1283 = vshrl.u32 %v1282, 7
        %v1284 = vsub.s32 %v1281, %v1283
        %v1285 = vrot.slane %v1271, %v1284
        %v1286 = vcombine.low %v1262, %v1278
        %v1287 = vcombine.high %v1262, %v1278
        %v1289 = vunpack.c.l.s4 1934713408
        %v1290 = vunpack.c.0.s8 %v1289
        %v1291 = vlaneseq
        %v1292 = vshrl.u32 %v1291, 7
        %v1293 = vsub.s32 %v1290, %v1292
        %v1294 = vrot.slane %v1286, %v1293
        %v1296 = vunpack.c.l.s4 1934713408
        %v1297 = vunpack.c.0.s8 %v1296
        %v1298 = vlaneseq
        %v1299 = vshrl.u32 %v1298, 7
        %v1300 = vsub.s32 %v1297, %v1299
        %v1301 = vrot.slane %v1287, %v1300
        %v1302 = vcombine.low %v1269, %v1285
        %v1303 = vcombine.high %v1269, %v1285
        %v1305 = vunpack.c.l.s4 1934713408
        %v1306 = vunpack.c.0.s8 %v1305
        %v1307 = vlaneseq
        %v1308 = vshrl.u32 %v1307, 7
        %v1309 = vsub.s32 %v1306, %v1308
        %v1310 = vrot.slane %v1302, %v1309
        %v1312 = vunpack.c.l.s4 1934713408
        %v1313 = vunpack.c.0.s8 %v1312
        %v1314 = vlaneseq
        %v1315 = vshrl.u32 %v1314, 7
        %v1316 = vsub.s32 %v1313, %v1315
        %v1317 = vrot.slane %v1303, %v1316
        %v1318 = vcombine.high %v1294, 0.0
        %v1319 = vcombine.high %v1301, 0.0
        %v1320 = vcombine.high %v1310, 0.0
        %v1321 = vcombine.high %v1317, 0.0
        %v1322 = vcombine.low %v1294, %v1301
        %v1324 = vunpack.c.l.s4 1983009808
        %v1325 = vunpack.c.0.s8 %v1324
        %v1326 = vlaneseq
        %v1327 = vshrl.u32 %v1326, 7
        %v1328 = vsub.s32 %v1325, %v1327
        %v1329 = vrot.slane %v1322, %v1328
        %v1330 = vcombine.low %v1318, %v1319
        %v1332 = vunpack.c.l.s4 1983009808
        %v1333 = vunpack.c.0.s8 %v1332
        %v1334 = vlaneseq
        %v1335 = vshrl.u32 %v1334, 7
        %v1336 = vsub.s32 %v1333, %v1335
        %v1337 = vrot.slane %v1330, %v1336
        %v1338 = vcombine.low %v1310, %v1317
        %v1340 = vunpack.c.l.s4 1983009808
        %v1341 = vunpack.c.0.s8 %v1340
        %v1342 = vlaneseq
        %v1343 = vshrl.u32 %v1342, 7
        %v1344 = vsub.s32 %v1341, %v1343
        %v1345 = vrot.slane %v1338, %v1344
        %v1346 = vcombine.low %v1320, %v1321
        %v1348 = vunpack.c.l.s4 1983009808
        %v1349 = vunpack.c.0.s8 %v1348
        %v1350 = vlaneseq
        %v1351 = vshrl.u32 %v1350, 7
        %v1352 = vsub.s32 %v1349, %v1351
        %v1353 = vrot.slane %v1346, %v1352
        %v1354 = vcombine.low %v1329, %v1337
        %v1355 = vcombine.high %v1329, %v1337
        %v1357 = vunpack.c.l.s4 1934713408
        %v1358 = vunpack.c.0.s8 %v1357
        %v1359 = vlaneseq
        %v1360 = vshrl.u32 %v1359, 7
        %v1361 = vsub.s32 %v1358, %v1360
        %v1362 = vrot.slane %v1354, %v1361
        %v1364 = vunpack.c.l.s4 1934713408
        %v1365 = vunpack.c.0.s8 %v1364
        %v1366 = vlaneseq
        %v1367 = vshrl.u32 %v1366, 7
        %v1368 = vsub.s32 %v1365, %v1367
        %v1369 = vrot.slane %v1355, %v1368
        %v1370 = vcombine.low %v1345, %v1353
        %v1371 = vcombine.high %v1345, %v1353
        %v1373 = vunpack.c.l.s4 1934713408
        %v1374 = vunpack.c.0.s8 %v1373
        %v1375 = vlaneseq
        %v1376 = vshrl.u32 %v1375, 7
        %v1377 = vsub.s32 %v1374, %v1376
        %v1378 = vrot.slane %v1370, %v1377
        %v1380 = vunpack.c.l.s4 1934713408
        %v1381 = vunpack.c.0.s8 %v1380
        %v1382 = vlaneseq
        %v1383 = vshrl.u32 %v1382, 7
        %v1384 = vsub.s32 %v1381, %v1383
        %v1385 = vrot.slane %v1371, %v1384
        %v1386 = vcombine.low %v1362, %v1378
        %v1387 = vcombine.high %v1362, %v1378
        %v1388 = vcombine.low %v1369, %v1385
        %v1389 = vcombine.high %v1369, %v1385
        %1391 = vrot.lane.b32.xlu0 %v1387, 8
        %v1392 = vpop.permute.xlu0 %1391
        %1395 = vrot.lane.b32.xlu0 %v1388, 16
        %v1396 = vpop.permute.xlu0 %1395
        %1399 = vrot.lane.b32.xlu0 %v1389, 24
        %v1400 = vpop.permute.xlu0 %1399
        %v1402 = vsel %vm836, %v1386, %v1392
        %vm1403 = vcmask 130048
        %v1404 = vsel %vm1403, %v1402, %v1396
        %vm1405 = vcmask 195584
        %v1406 = vsel %vm1405, %v1404, %v1400
        %v1407 = vmax.f32 %v369, 0.0
        %1409 = vrot.lane.b32.xlu0 %v1407, 64
        %v1410 = vpop.permute.xlu0 %1409
        %v1412 = vsel %vm276, %v1406, %v1410
        %v1413 = vpack.c.bf16 %v1412, %v1412
        %v1414 = vld [vmem:[%s5] sm:$0xf]
        %v1415 = vld [vmem:[%s5 + $0x4] sm:$0xf]
        %v1416 = vld [vmem:[%s5 + $0x8] sm:$0xf]
        %v1417 = vld [vmem:[%s5 + $0xc] sm:$0xf]
        %v1418 = vld [vmem:[%s5 + $0x10] sm:$0xf]
        %v1419 = vld [vmem:[%s6] sm:$0x1]
        %v1421 = vlaneseq
        %v1422 = vshrl.u32 %v1421, 7
        %v1423 = vsub.s32 0, %v1422
        %v1424 = vrot.slane %v1419, %v1423
        %v1431 = vunpack.c.l.b16 %v1414
        %v1432 = vunpack.c.l.b16 %v1415
        %v1433 = vunpack.c.l.b16 %v1416
        %v1434 = vunpack.c.l.b16 %v1417
        %v1435 = vunpack.c.l.b16 %v1418
        %v1436 = vpack.c.b16 %v1432, %v1431
        %v1437 = vpack.c.b16 %v1434, %v1433
        %v1438 = vpack.c.b16 %v1435, %v1435
        %vm1441 = vcmask 326656
        %v1443 = vsel %vm1441, %v1413, 0
        %v1446 = vsel %vm1072, %v1438, 0
        %1448 = vmatprep.subr.bf16.mxu0 0
        %1449 = vmatpush1.bf16.msra.mxu0 %v1436
        %1450 = vmatprep.subr.bf16.mxu0 0
        %1451 = vmatpush1.bf16.msra.mxu0 %v1437
        %1452 = vmatprep.subr.bf16.mxu0 0
        %1453 = vmatpush1.bf16.msra.mxu0 %v1446
        %1454 = vmatprep.subr.bf16.mxu0 0
        %1455 = vmatpush1.bf16.msra.mxu0 0
        %1456 = vmatprep.subr.bf16.mxu0 0
        %1457 = vmatpush1.bf16.msra.mxu0 0
        %1458 = vmatprep.subr.bf16.mxu0 0
        %1459 = vmatpush1.bf16.msra.mxu0 0
        %1460 = vmatprep.subr.bf16.mxu0 0
        %1461 = vmatpush1.bf16.msra.mxu0 0
        %1462 = vmatprep.subr.bf16.mxu0 0
        %1463 = vmatpush1.bf16.msra.mxu0 0
        %1464 = vmatprep.subr.bf16.mxu0 0
        %1465 = vmatpush1.bf16.msra.mxu0 0
        %1466 = vmatprep.subr.bf16.mxu0 0
        %1467 = vmatpush1.bf16.msra.mxu0 0
        %1468 = vmatprep.subr.bf16.mxu0 0
        %1469 = vmatpush1.bf16.msra.mxu0 0
        %1470 = vmatprep.subr.bf16.mxu0 0
        %1471 = vmatpush1.bf16.msra.mxu0 0
        %1472 = vmatprep.subr.bf16.mxu0 0
        %1473 = vmatpush1.bf16.msra.mxu0 0
        %1474 = vmatprep.subr.bf16.mxu0 0
        %1475 = vmatpush1.bf16.msra.mxu0 0
        %1476 = vmatprep.subr.bf16.mxu0 0
        %1477 = vmatpush1.bf16.msra.mxu0 0
        %1478 = vmatprep.subr.bf16.mxu0 0
        %1479 = vmatpush1.bf16.msra.mxu0 0
        %1480 = vmatprep.mubr.bf16.mxu0 0
        %1481 = vmatmul.mubr.bf16.gmra.mrb[0].mxu0 %v1443
        %v1482 = vpop.f32.mrb[0].mxu0
        %v1483 = vadd.f32 %v1424, %v1482
        %v1484 = vpop.f32.mrb[0].mxu0
        %v1485 = vpop.f32.mrb[0].mxu0
        %v1486 = vpop.f32.mrb[0].mxu0
        %1487 = vdwg.mxu0
        %v1488 = vadd.f32 %v306, %v1483
        %1489 = vst.msk [vmem:[%s269] sm:$0xff] %vm276, %v1488
        %s1490 = sand.u32 %s181, 1
        %s1491 = scalar_lea.sflag [#allocation3], %s1490
        %s1492 = sand.u32 %s181, 1
        %s1493 = smul.addr %s1492, 8
        %s1494 = scalar_lea.vmem [#allocation2], %s1493
        // Predicated region
        $region49: #{tpu_custom_call.1} parent=47 // pred_check
          %p1495 = pneg %p191
        $region50: #{tpu_custom_call.1} parent=47 // pred_check_branch
          %1497 = sbr.rel (%p1495) target = $region52
        $region51: #{tpu_custom_call.1} parent=47 // pred_region
          %s1499 = ssub.s32 128, 128
          %1500 = vsyncadd %s1491, %s1499
          %s1501 = smul.addr %s21, 128
          %s1502 = scalar_lea.hbm %s7, %s1501
          %s1504 = sshll.u32 %s1494, 4
          %s1505 = int_to_ptr.vmem [resolvable:$true] %s1504
          %1507 = dma.vmem_to_hbm [thread:$0]  %s1505, 128, %s1502, %s1491
        $region52: #{tpu_custom_call.1} parent=47 // pred_fallthru
          _
      $region48: #{tpu_custom_call.1} parent=5 // pred_fallthru
        _
      %p1508 = scmp.le.s32.totalorder 2, %s16
      // Predicated region
      $region53: #{tpu_custom_call.1} parent=5 // pred_check
        %p1509 = pneg %p1508
      $region54: #{tpu_custom_call.1} parent=5 // pred_check_branch
        %1511 = sbr.rel (%p1509) target = $region56
      $region55: #{tpu_custom_call.1} parent=5 // pred_region
        %s1512 = ssub.s32 %s16, 2
        // Predicated region
        $region57: #{tpu_custom_call.1} parent=55 // pred_check
          %p1513 = pneg %p197
        $region58: #{tpu_custom_call.1} parent=55 // pred_check_branch
          %1515 = sbr.rel (%p1513) target = $region60
        $region59: #{tpu_custom_call.1} parent=55 // pred_region
          %s1516 = sand.u32 %s182, 1
          %s1517 = scalar_lea.sflag [#allocation3], %s1516
          %s1518 = sand.u32 %s182, 1
          %s1519 = smul.addr %s1518, 8
          %s1520 = scalar_lea.vmem [#allocation2], %s1519
          %1521 = dma.done %s1517, 128
        $region60: #{tpu_custom_call.1} parent=55 // pred_fallthru
          _
      $region56: #{tpu_custom_call.1} parent=5 // pred_fallthru
        _
    $region6: #{tpu_custom_call.1} parent=1 // loop_footer
      %s20 = sadd.s32 1, %s16
    $region7: #{tpu_custom_call.1} parent=1 // loop_footer_branch
      %15 = sbr.rel target = $region3
    $region8: #{tpu_custom_call.1} parent=1 // loop_exit
      _
    %1522 = vsyncpa [#allocation3], 1
    %s1523 = scalar_lea.sflag [#allocation3], 1
    %1524 = vsyncpa %s1523, 1

</llo_original>
